<compile_context>
chip_gen: v6e
topology: v6e:2x2x1
jax: 0.10.0
libtpu: 0.0.40
codegen_flags: <defaults>
</compile_context>

<pallas_src>
import functools

import jax
import jax.numpy as jnp
from jax.experimental import pallas as pl
from jax.experimental.pallas import tpu as pltpu

# ---------------- small, MoCo-consistent hyperparameters -------------------
DIM = 128                 # MoCo feature dim (module default)
DIM_MLP = 128             # hidden width of the MLP head (encoder.fc in-dim)
NUM_LABELED_CLASSES = 4   # scaled down from 500
NUM_MULTI_CENTERS = 5     # module default
STEP = 12                 # module default
K_NEG = 16                # "K": #negative centroids sampled (scaled from 16384)
M_MOMENTUM = 0.999
T = 0.07
N_BATCH = 8
C, H, W = 4, 8, 8         # FEAT_IN = 256: two clean 128-lane tiles (no pad)
FEAT_IN = C * H * W
NUM_CLUSTERS = 64
NUM_SAMPLES = 16
QUEUE_LEN = NUM_LABELED_CLASSES * STEP
LANES = 128               # TPU lane width; logits are written as 128-wide slabs
W_ROWS = FEAT_IN + 2 * DIM_MLP   # rows of the stacked per-encoder weight slab


# ---------------------------- fused Pallas kernel ----------------------------
def _moco_fused_kernel(
        x_ref, tgt_ref, ptr_ref,
        wq_ref, bq_ref, wk_ref, bk_ref,
        queue_ref, pos_ref, neg_ref,
        scl_ref, mcl_ref, wk_o, bk_o, queue_o,
        ptr_scr,
        *, m, inv_t, n):
    one_m = 1.0 - m
    f0, f1, f2 = FEAT_IN, FEAT_IN + DIM_MLP, FEAT_IN + 2 * DIM_MLP

    def encode(x, w_ref_, b_ref_):
        # synthetic encoder: Linear(backbone proxy) -> ReLU -> MLP head -> L2 norm
        feat = jnp.maximum(
            jnp.dot(x, w_ref_[0:f0, :], preferred_element_type=jnp.float32)
            + b_ref_[0:1, :], 0.0)
        h = jnp.maximum(
            jnp.dot(feat, w_ref_[f0:f1, :], preferred_element_type=jnp.float32)
            + b_ref_[1:2, :], 0.0)
        logits = (jnp.dot(h, w_ref_[f1:f2, :], preferred_element_type=jnp.float32)
                  + b_ref_[2:3, :])
        # F.normalize(dim=1): rsqrt runs on the otherwise-idle EUP slot.
        inv_norm = jax.lax.rsqrt(
            jnp.maximum(jnp.sum(logits * logits, axis=1, keepdims=True), 1e-24))
        return logits * inv_norm

    # ---- query encoder: both query batches fused into one [2n, F] pass ----
    q2 = encode(x_ref[0:2 * n, :], wq_ref, bq_ref)
    q = q2[:n, :]        # MCL queries (im_q)
    q_lb = q2[n:, :]     # SCL queries (im_q_lb)

    # ---- momentum update of the key encoder: blend, store in place, and
    #      reload from the OUTPUT refs only (bounds vreg live ranges and
    #      avoids reading the aliased stale inputs after the write) ----
    wk_o[...] = wk_ref[...] * m + wq_ref[...] * one_m
    bk_o[...] = bk_ref[...] * m + bq_ref[...] * one_m

    # ---- key encoder on the freshly blended weights ----
    k_lb = encode(x_ref[2 * n:3 * n, :], wk_o, bk_o)

    lane = jax.lax.broadcasted_iota(jnp.int32, (n, LANES), 1)

    # ---- SCL logits: column 0 = q_lb.k_lb, columns 1..QUEUE_LEN = q_lb.queue.
    #      The queue is pre-shifted by one row, so no pltpu.roll is needed. ----
    l_aug = jnp.sum(q_lb * k_lb, axis=1, keepdims=True)
    l_sup = jax.lax.dot_general(
        q_lb, queue_ref[...],
        dimension_numbers=(((1,), (1,)), ((), ())),
        preferred_element_type=jnp.float32)            # [n, 128]
    scl_ref[...] = jnp.where(lane == 0,
                             jnp.broadcast_to(l_aug, (n, LANES)),
                             l_sup) * inv_t

    # ---- MCL logits: column 0 = q.pos_centroid, columns 1..K_NEG = q.negs
    #      (neg slab also pre-shifted; extra columns are sliced away). ----
    pos = jnp.sum(q * pos_ref[...], axis=1, keepdims=True)
    neg = jax.lax.dot_general(
        q, neg_ref[...],
        dimension_numbers=(((1,), (1,)), ((), ())),
        preferred_element_type=jnp.float32)             # [n, 128]
    mcl_ref[...] = jnp.where(lane == 0,
                             jnp.broadcast_to(pos, (n, LANES)),
                             neg)

    # ---- SCL queue enqueue (after the logits matmul consumed the old queue):
    #      contiguous 128-lane row writes at dynamic sublane offsets. ----
    queue_o[...] = queue_ref[...]
    for l in range(NUM_LABELED_CLASSES):          # copy ptrs into SMEM scratch
        ptr_scr[l] = ptr_ref[l]
    for i in range(n):                            # n is small and static
        lbl = tgt_ref[i]
        p = ptr_scr[lbl]
        queue_o[pl.ds(p + 1, 1), :] = k_lb[i:i + 1, :]   # +1: pre-shifted queue
        base = lbl * STEP                          # scl_queue_loc[lbl] == lbl*STEP
        nxt = p + 1
        ptr_scr[lbl] = jnp.where(nxt - base >= STEP, base, nxt)


# ---------------------------- kernel wrapper ---------------------------------
def moco_fused_call(x_all, targets, queue_ptr, pq, pk, queue_pad, pos_c, neg_pad):
    n = N_BATCH
    vmem = functools.partial(pl.BlockSpec, memory_space=pltpu.MemorySpace.VMEM)
    smem = functools.partial(pl.BlockSpec, memory_space=pltpu.MemorySpace.SMEM)
    out_shape = (
        jax.ShapeDtypeStruct((n, LANES), jnp.float32),        # scl (padded)
        jax.ShapeDtypeStruct((n, LANES), jnp.float32),        # mcl (padded)
        jax.ShapeDtypeStruct(pk['w'].shape, jnp.float32),     # params_k.w (in place)
        jax.ShapeDtypeStruct(pk['b'].shape, jnp.float32),     # params_k.b (in place)
        jax.ShapeDtypeStruct(queue_pad.shape, jnp.float32),   # queue (in place)
    )
    outs = pl.pallas_call(
        functools.partial(_moco_fused_kernel, m=M_MOMENTUM, inv_t=1.0 / T, n=n),
        out_shape=out_shape,
        in_specs=[vmem(), smem(), smem(),
                  vmem(), vmem(), vmem(), vmem(),
                  vmem(), vmem(), vmem()],
        out_specs=tuple(vmem() for _ in range(5)),
        scratch_shapes=[pltpu.SMEM((NUM_LABELED_CLASSES,), jnp.int32)],
        # params_k (inputs 5,6) and the padded queue (input 7) updated in place.
        input_output_aliases={5: 2, 6: 3, 7: 4},
    )(x_all, targets, queue_ptr,
      pq['w'], pq['b'], pk['w'], pk['b'],
      queue_pad, pos_c, neg_pad)
    scl_pad, mcl_pad, wk_new, bk_new, queue_new = outs
    return scl_pad, mcl_pad, {'w': wk_new, 'b': bk_new}, queue_new


# ---------------------------- plain-JAX glue --------------------------------
def _prepare_mcl(cluster_result, index, b):
    """Density-adjusted centroids; positive centroids per row; deterministic
    on-device negative-centroid selection (no host sync)."""
    im2cluster = cluster_result['im2cluster']
    centroids_adj = cluster_result['centroids'] / cluster_result['density'][:, None]
    num_clusters = centroids_adj.shape[0]

    pos_ids = im2cluster[:, index].reshape(NUM_MULTI_CENTERS * b)
    pos_centroids = centroids_adj[pos_ids].reshape(
        NUM_MULTI_CENTERS, b, -1).mean(axis=0)

    # TODO(synk): random.sample over the complement is replaced by a
    # deterministic (smallest-id first-K) on-device top_k selection for
    # reproducibility/jit-ability; candidate set matches PyTorch's
    # range(im2cluster.max()+1) minus the positive ids.
    ids = jnp.arange(num_clusters, dtype=jnp.int32)
    pos_mask = jnp.zeros((num_clusters,), jnp.bool_).at[pos_ids].set(True)
    valid = jnp.logical_not(pos_mask) & (ids <= im2cluster.max())
    score = jnp.where(valid, num_clusters - ids, -1)
    _, neg_sel = jax.lax.top_k(score, K_NEG)
    return pos_centroids, neg_sel.astype(jnp.int32), centroids_adj


@jax.jit
def moco_forward(params_q, params_k, queue_pad, scl_queue_ptr,
                 im_q, im_q_lb, im_k_lb, targets, cluster_result, index):
    b = im_q_lb.shape[0]
    # concat_all_gather / _batch_shuffle_ddp / _batch_unshuffle_ddp are
    # identities at world_size=1.  All three image batches ride in one array.
    x_all = jnp.concatenate(
        [im_q.reshape(b, -1), im_q_lb.reshape(b, -1), im_k_lb.reshape(b, -1)],
        axis=0)

    pos_c, neg_sel, centroids_adj = _prepare_mcl(cluster_result, index, b)
    # Negatives gathered directly into a pre-shifted 128-row slab: rows
    # 1..K_NEG hold the selected centroids; other rows map to columns that are
    # sliced away (and column 0 is overwritten with the positive logits).
    neg_idx = jnp.zeros((LANES,), jnp.int32).at[1:1 + K_NEG].set(neg_sel)
    neg_pad = centroids_adj[neg_idx]

    targets = targets.astype(jnp.int32)
    scl_pad, mcl_pad, params_k_new, queue_pad_new = moco_fused_call(
        x_all, targets, scl_queue_ptr.astype(jnp.int32),
        params_q, params_k, queue_pad, pos_c, neg_pad)

    scl_logits = scl_pad[:, :1 + QUEUE_LEN]
    mcl_logits = mcl_pad[:, :1 + K_NEG]

    # SCL labels (one-hot repeated `step` times per class, aug label prepended)
    one_hot = jax.nn.one_hot(targets, NUM_LABELED_CLASSES, dtype=jnp.int32)
    scl_labels = jnp.concatenate(
        [jnp.ones((b, 1), jnp.int32), jnp.repeat(one_hot, STEP, axis=1)], axis=1)

    # Queue-pointer update: closed-form vectorized equivalent of the sequential
    # enqueue (the row writes themselves already happened inside the kernel).
    counts = one_hot.sum(axis=0)
    loc = jnp.arange(NUM_LABELED_CLASSES, dtype=jnp.int32) * STEP
    scl_queue_ptr_new = loc + (scl_queue_ptr - loc + counts) % STEP

    mcl_labels = jnp.zeros((b,), jnp.int32)
    return (scl_logits, scl_labels, mcl_logits, mcl_labels,
            params_k_new, queue_pad_new, scl_queue_ptr_new)


# ---------------------------- reference (pure JAX) ---------------------------
def _ref_encoder(x, p):
    feat = jnp.maximum(x @ p['wb'] + p['bb'], 0.0)
    h = jnp.maximum(feat @ p['w1'] + p['b1'], 0.0)
    logits = h @ p['w2'] + p['b2']
    nrm = jnp.maximum(jnp.linalg.norm(logits, axis=1, keepdims=True), 1e-12)
    return logits / nrm


def _ref_forward(pq, pk, scl_queue, im_q, im_q_lb, im_k_lb, pos_c, neg_c):
    q = _ref_encoder(im_q.reshape(im_q.shape[0], -1), pq)
    q_lb = _ref_encoder(im_q_lb.reshape(im_q_lb.shape[0], -1), pq)
    pk_new = jax.tree_util.tree_map(
        lambda a, kk: kk * M_MOMENTUM + a * (1.0 - M_MOMENTUM), pq, pk)
    k_lb = _ref_encoder(im_k_lb.reshape(im_k_lb.shape[0], -1), pk_new)
    l_aug = jnp.sum(q_lb * k_lb, axis=1, keepdims=True)
    l_sup = q_lb @ scl_queue.T
    scl = jnp.concatenate([l_aug, l_sup], axis=1) / T
    pos = jnp.sum(q * pos_c, axis=1, keepdims=True)
    neg = q @ neg_c.T
    mcl = jnp.concatenate([pos, neg], axis=1)
    return scl, mcl, pk_new, k_lb


def _stack_params(p):
    return {'w': jnp.concatenate([p['wb'], p['w1'], p['w2']], axis=0),
            'b': jnp.concatenate([p['bb'], p['b1'], p['b2']], axis=0)}


# --------------------------------- main --------------------------------------
if __name__ == "__main__":
    key = jax.random.PRNGKey(0)
    ks = jax.random.split(key, 16)

    def lin_init(k, shape, scale):
        return jax.random.normal(k, shape, jnp.float32) * scale

    pq_raw = {
        'wb': lin_init(ks[0], (FEAT_IN, DIM_MLP), 0.05),
        'bb': lin_init(ks[1], (1, DIM_MLP), 0.01),
        'w1': lin_init(ks[2], (DIM_MLP, DIM_MLP), 0.08),
        'b1': lin_init(ks[3], (1, DIM_MLP), 0.01),
        'w2': lin_init(ks[4], (DIM_MLP, DIM), 0.08),
        'b2': lin_init(ks[5], (1, DIM), 0.01),
    }
    # key encoder initialized as a copy of the query encoder (as in __init__)
    pk_raw = jax.tree_util.tree_map(lambda a: a.copy(), pq_raw)

    # Model state for the kernel: stacked weight/bias slabs (built once).
    params_q = _stack_params(pq_raw)
    params_k = _stack_params(pk_raw)

    # Row-major queue [QUEUE_LEN, DIM]; each row (key) L2-normalized
    # (equivalent to F.normalize(dim=0) of the PyTorch [DIM, QUEUE_LEN] queue).
    scl_queue = jax.random.normal(ks[6], (QUEUE_LEN, DIM), jnp.float32)
    scl_queue = scl_queue / jnp.maximum(
        jnp.linalg.norm(scl_queue, axis=1, keepdims=True), 1e-12)
    # Persistent, padded, one-row-pre-shifted queue (rows 1..QUEUE_LEN).
    queue_pad = jnp.zeros((LANES, DIM), jnp.float32).at[1:1 + QUEUE_LEN].set(scl_queue)
    scl_queue_ptr = jnp.arange(0, QUEUE_LEN, STEP, dtype=jnp.int32)

    im_q = jax.random.normal(ks[7], (N_BATCH, C, H, W), jnp.float32)
    im_q_lb = jax.random.normal(ks[8], (N_BATCH, C, H, W), jnp.float32)
    im_k_lb = jax.random.normal(ks[9], (N_BATCH, C, H, W), jnp.float32)
    targets = jax.random.randint(ks[10], (N_BATCH,), 0, NUM_LABELED_CLASSES,
                                 dtype=jnp.int32)
    index = jnp.arange(N_BATCH, dtype=jnp.int32)

    im2cluster = jax.random.randint(
        ks[11], (NUM_MULTI_CENTERS, NUM_SAMPLES), 0, NUM_CLUSTERS)
    im2cluster = im2cluster.at[0, 0].set(NUM_CLUSTERS - 1)
    cluster_result = {
        'im2cluster': im2cluster,
        'centroids': jax.random.normal(ks[12], (NUM_CLUSTERS, DIM), jnp.float32),
        'density': jax.random.uniform(ks[13], (NUM_CLUSTERS,), jnp.float32,
                                      0.5, 1.5),
    }

    outs = moco_forward(params_q, params_k, queue_pad, scl_queue_ptr,
                        im_q, im_q_lb, im_k_lb, targets, cluster_result, index)
    outs = jax.block_until_ready(outs)
    (scl_logits, scl_labels, mcl_logits, mcl_labels,
     params_k_new, queue_pad_new, scl_queue_ptr_new) = outs

    # shape / sanity checks
    assert scl_logits.shape == (N_BATCH, 1 + QUEUE_LEN)
    assert scl_labels.shape == (N_BATCH, 1 + QUEUE_LEN)
    assert mcl_logits.shape == (N_BATCH, 1 + K_NEG)
    assert mcl_labels.shape == (N_BATCH,)
    assert queue_pad_new.shape == (LANES, DIM)
    assert bool(jnp.all(jnp.isfinite(scl_logits)))
    assert bool(jnp.all(jnp.isfinite(mcl_logits)))

    # numerical check of the fused Pallas forward vs a pure-JAX reference
    pos_c, neg_sel, cadj = _prepare_mcl(cluster_result, index, N_BATCH)
    neg_c = cadj[neg_sel]
    ref_scl, ref_mcl, ref_pk, ref_k_lb = _ref_forward(
        pq_raw, pk_raw, scl_queue, im_q, im_q_lb, im_k_lb, pos_c, neg_c)
    assert bool(jnp.allclose(scl_logits, ref_scl, rtol=2e-3, atol=2e-3))
    assert bool(jnp.allclose(mcl_logits, ref_mcl, rtol=2e-3, atol=2e-3))

    ref_pk_stacked = _stack_params(ref_pk)
    assert bool(jnp.allclose(params_k_new['w'], ref_pk_stacked['w'],
                             rtol=1e-5, atol=1e-6))
    assert bool(jnp.allclose(params_k_new['b'], ref_pk_stacked['b'],
                             rtol=1e-5, atol=1e-6))

    # in-kernel queue enqueue + pointer update vs a sequential reference
    ref_queue = scl_queue
    ptrs = [int(v) for v in scl_queue_ptr]
    for i in range(N_BATCH):
        lbl = int(targets[i])
        p = ptrs[lbl]
        ref_queue = ref_queue.at[p, :].set(ref_k_lb[i])
        ptrs[lbl] = (p + 1) % STEP + lbl * STEP
    assert bool(jnp.allclose(queue_pad_new[1:1 + QUEUE_LEN], ref_queue,
                             rtol=2e-3, atol=2e-3))
    assert bool(jnp.all(queue_pad_new[0] == 0.0))
    assert [int(v) for v in scl_queue_ptr_new] == ptrs

    print("KERNEL_OK")
</pallas_src>

<mosaic_0001>
module attributes {stable_mosaic.version = 11 : i64} {
  func.func @_moco_fused_kernel(%arg0: memref<24x256xf32, #tpu.memory_space<vmem>>, %arg1: memref<8xi32, #tpu.memory_space<smem>>, %arg2: memref<4xi32, #tpu.memory_space<smem>>, %arg3: memref<512x128xf32, #tpu.memory_space<vmem>>, %arg4: memref<3x128xf32, #tpu.memory_space<vmem>>, %arg5: memref<512x128xf32, #tpu.memory_space<vmem>>, %arg6: memref<3x128xf32, #tpu.memory_space<vmem>>, %arg7: memref<128x128xf32, #tpu.memory_space<vmem>>, %arg8: memref<8x128xf32, #tpu.memory_space<vmem>>, %arg9: memref<128x128xf32, #tpu.memory_space<vmem>>, %arg10: memref<8x128xf32, #tpu.memory_space<vmem>>, %arg11: memref<8x128xf32, #tpu.memory_space<vmem>>, %arg12: memref<512x128xf32, #tpu.memory_space<vmem>>, %arg13: memref<3x128xf32, #tpu.memory_space<vmem>>, %arg14: memref<128x128xf32, #tpu.memory_space<vmem>>, %arg15: memref<4xi32, #tpu.memory_space<smem>>) attributes {dimension_semantics = [], scalar_prefetch = 0 : i64, scratch_operands = 1 : i64, tpu.core_type = #tpu.core_type<tc>} {
    %c0 = arith.constant 0 : index
    %c0_0 = arith.constant 0 : index
    %0 = vector.load %arg0[%c0, %c0_0] : memref<24x256xf32, #tpu.memory_space<vmem>>, vector<16x256xf32>
    %c0_1 = arith.constant 0 : index
    %c0_2 = arith.constant 0 : index
    %1 = vector.load %arg3[%c0_1, %c0_2] : memref<512x128xf32, #tpu.memory_space<vmem>>, vector<256x128xf32>
    %cst = arith.constant dense<0.000000e+00> : vector<16x128xf32>
    %2 = tpu.matmul %0, %1, %cst {dimension_numbers = #tpu.dot_dimension_numbers<[1], [0], [0], [1], [0, 0, 1, 1], [], []>} : vector<16x256xf32>, vector<256x128xf32>, vector<16x128xf32> -> vector<16x128xf32>
    %c0_3 = arith.constant 0 : index
    %c0_4 = arith.constant 0 : index
    %3 = vector.load %arg4[%c0_3, %c0_4] : memref<3x128xf32, #tpu.memory_space<vmem>>, vector<1x128xf32>
    %4 = vector.broadcast %3 : vector<1x128xf32> to vector<16x128xf32>
    %5 = arith.addf %2, %4 : vector<16x128xf32>
    %cst_5 = arith.constant 0.000000e+00 : f32
    %6 = vector.broadcast %cst_5 : f32 to vector<16x128xf32>
    %7 = arith.maximumf %5, %6 : vector<16x128xf32>
    %c256 = arith.constant 256 : index
    %c0_6 = arith.constant 0 : index
    %8 = vector.load %arg3[%c256, %c0_6] : memref<512x128xf32, #tpu.memory_space<vmem>>, vector<128x128xf32>
    %cst_7 = arith.constant dense<0.000000e+00> : vector<16x128xf32>
    %9 = tpu.matmul %7, %8, %cst_7 {dimension_numbers = #tpu.dot_dimension_numbers<[1], [0], [0], [1], [0, 0, 1, 1], [], []>} : vector<16x128xf32>, vector<128x128xf32>, vector<16x128xf32> -> vector<16x128xf32>
    %c1 = arith.constant 1 : index
    %c0_8 = arith.constant 0 : index
    %10 = vector.load %arg4[%c1, %c0_8] : memref<3x128xf32, #tpu.memory_space<vmem>>, vector<1x128xf32>
    %11 = vector.broadcast %10 : vector<1x128xf32> to vector<16x128xf32>
    %12 = arith.addf %9, %11 : vector<16x128xf32>
    %cst_9 = arith.constant 0.000000e+00 : f32
    %13 = vector.broadcast %cst_9 : f32 to vector<16x128xf32>
    %14 = arith.maximumf %12, %13 : vector<16x128xf32>
    %c384 = arith.constant 384 : index
    %c0_10 = arith.constant 0 : index
    %15 = vector.load %arg3[%c384, %c0_10] : memref<512x128xf32, #tpu.memory_space<vmem>>, vector<128x128xf32>
    %cst_11 = arith.constant dense<0.000000e+00> : vector<16x128xf32>
    %16 = tpu.matmul %14, %15, %cst_11 {dimension_numbers = #tpu.dot_dimension_numbers<[1], [0], [0], [1], [0, 0, 1, 1], [], []>} : vector<16x128xf32>, vector<128x128xf32>, vector<16x128xf32> -> vector<16x128xf32>
    %c2 = arith.constant 2 : index
    %c0_12 = arith.constant 0 : index
    %17 = vector.load %arg4[%c2, %c0_12] : memref<3x128xf32, #tpu.memory_space<vmem>>, vector<1x128xf32>
    %18 = vector.broadcast %17 : vector<1x128xf32> to vector<16x128xf32>
    %19 = arith.addf %16, %18 : vector<16x128xf32>
    %20 = arith.mulf %19, %19 : vector<16x128xf32>
    %cst_13 = arith.constant dense<0.000000e+00> : vector<16xf32>
    %21 = vector.multi_reduction <add>, %20, %cst_13 [1] : vector<16x128xf32> to vector<16xf32>
    %22 = vector.shape_cast %21 : vector<16xf32> to vector<16x1xf32>
    %cst_14 = arith.constant 1.000000e-24 : f32
    %23 = vector.broadcast %cst_14 : f32 to vector<16x1xf32>
    %24 = arith.maximumf %22, %23 : vector<16x1xf32>
    %25 = math.rsqrt %24 : vector<16x1xf32>
    %26 = vector.broadcast %25 : vector<16x1xf32> to vector<16x128xf32>
    %27 = arith.mulf %19, %26 : vector<16x128xf32>
    %28 = vector.extract_strided_slice %27 {offsets = [0, 0], sizes = [8, 128], strides = [1, 1]} : vector<16x128xf32> to vector<8x128xf32>
    %29 = vector.extract_strided_slice %27 {offsets = [8, 0], sizes = [8, 128], strides = [1, 1]} : vector<16x128xf32> to vector<8x128xf32>
    %c0_15 = arith.constant 0 : index
    %c0_16 = arith.constant 0 : index
    %30 = vector.load %arg5[%c0_15, %c0_16] : memref<512x128xf32, #tpu.memory_space<vmem>>, vector<512x128xf32>
    %cst_17 = arith.constant 9.990000e-01 : f32
    %31 = vector.broadcast %cst_17 : f32 to vector<512x128xf32>
    %32 = arith.mulf %30, %31 : vector<512x128xf32>
    %c0_18 = arith.constant 0 : index
    %c0_19 = arith.constant 0 : index
    %33 = vector.load %arg3[%c0_18, %c0_19] : memref<512x128xf32, #tpu.memory_space<vmem>>, vector<512x128xf32>
    %cst_20 = arith.constant 1.000000e-03 : f32
    %34 = vector.broadcast %cst_20 : f32 to vector<512x128xf32>
    %35 = arith.mulf %33, %34 : vector<512x128xf32>
    %36 = arith.addf %32, %35 : vector<512x128xf32>
    %c0_21 = arith.constant 0 : index
    %c0_22 = arith.constant 0 : index
    %37 = vector.load %arg12[%c0_21, %c0_22] : memref<512x128xf32, #tpu.memory_space<vmem>>, vector<512x128xf32>
    tpu.vector_store %arg12[%c0_21, %c0_22], %36 {strides = array<i32>} : memref<512x128xf32, #tpu.memory_space<vmem>>, vector<512x128xf32>,
    %c0_23 = arith.constant 0 : index
    %c0_24 = arith.constant 0 : index
    %38 = vector.load %arg6[%c0_23, %c0_24] : memref<3x128xf32, #tpu.memory_space<vmem>>, vector<3x128xf32>
    %cst_25 = arith.constant 9.990000e-01 : f32
    %39 = vector.broadcast %cst_25 : f32 to vector<3x128xf32>
    %40 = arith.mulf %38, %39 : vector<3x128xf32>
    %c0_26 = arith.constant 0 : index
    %c0_27 = arith.constant 0 : index
    %41 = vector.load %arg4[%c0_26, %c0_27] : memref<3x128xf32, #tpu.memory_space<vmem>>, vector<3x128xf32>
    %cst_28 = arith.constant 1.000000e-03 : f32
    %42 = vector.broadcast %cst_28 : f32 to vector<3x128xf32>
    %43 = arith.mulf %41, %42 : vector<3x128xf32>
    %44 = arith.addf %40, %43 : vector<3x128xf32>
    %c0_29 = arith.constant 0 : index
    %c0_30 = arith.constant 0 : index
    %45 = vector.load %arg13[%c0_29, %c0_30] : memref<3x128xf32, #tpu.memory_space<vmem>>, vector<3x128xf32>
    tpu.vector_store %arg13[%c0_29, %c0_30], %44 {strides = array<i32>} : memref<3x128xf32, #tpu.memory_space<vmem>>, vector<3x128xf32>,
    %c16 = arith.constant 16 : index
    %c0_31 = arith.constant 0 : index
    %46 = vector.load %arg0[%c16, %c0_31] : memref<24x256xf32, #tpu.memory_space<vmem>>, vector<8x256xf32>
    %c0_32 = arith.constant 0 : index
    %c0_33 = arith.constant 0 : index
    %47 = vector.load %arg12[%c0_32, %c0_33] : memref<512x128xf32, #tpu.memory_space<vmem>>, vector<256x128xf32>
    %cst_34 = arith.constant dense<0.000000e+00> : vector<8x128xf32>
    %48 = tpu.matmul %46, %47, %cst_34 {dimension_numbers = #tpu.dot_dimension_numbers<[1], [0], [0], [1], [0, 0, 1, 1], [], []>} : vector<8x256xf32>, vector<256x128xf32>, vector<8x128xf32> -> vector<8x128xf32>
    %c0_35 = arith.constant 0 : index
    %c0_36 = arith.constant 0 : index
    %49 = vector.load %arg13[%c0_35, %c0_36] : memref<3x128xf32, #tpu.memory_space<vmem>>, vector<1x128xf32>
    %50 = vector.broadcast %49 : vector<1x128xf32> to vector<8x128xf32>
    %51 = arith.addf %48, %50 : vector<8x128xf32>
    %cst_37 = arith.constant 0.000000e+00 : f32
    %52 = vector.broadcast %cst_37 : f32 to vector<8x128xf32>
    %53 = arith.maximumf %51, %52 : vector<8x128xf32>
    %c256_38 = arith.constant 256 : index
    %c0_39 = arith.constant 0 : index
    %54 = vector.load %arg12[%c256_38, %c0_39] : memref<512x128xf32, #tpu.memory_space<vmem>>, vector<128x128xf32>
    %cst_40 = arith.constant dense<0.000000e+00> : vector<8x128xf32>
    %55 = tpu.matmul %53, %54, %cst_40 {dimension_numbers = #tpu.dot_dimension_numbers<[1], [0], [0], [1], [0, 0, 1, 1], [], []>} : vector<8x128xf32>, vector<128x128xf32>, vector<8x128xf32> -> vector<8x128xf32>
    %c1_41 = arith.constant 1 : index
    %c0_42 = arith.constant 0 : index
    %56 = vector.load %arg13[%c1_41, %c0_42] : memref<3x128xf32, #tpu.memory_space<vmem>>, vector<1x128xf32>
    %57 = vector.broadcast %56 : vector<1x128xf32> to vector<8x128xf32>
    %58 = arith.addf %55, %57 : vector<8x128xf32>
    %cst_43 = arith.constant 0.000000e+00 : f32
    %59 = vector.broadcast %cst_43 : f32 to vector<8x128xf32>
    %60 = arith.maximumf %58, %59 : vector<8x128xf32>
    %c384_44 = arith.constant 384 : index
    %c0_45 = arith.constant 0 : index
    %61 = vector.load %arg12[%c384_44, %c0_45] : memref<512x128xf32, #tpu.memory_space<vmem>>, vector<128x128xf32>
    %cst_46 = arith.constant dense<0.000000e+00> : vector<8x128xf32>
    %62 = tpu.matmul %60, %61, %cst_46 {dimension_numbers = #tpu.dot_dimension_numbers<[1], [0], [0], [1], [0, 0, 1, 1], [], []>} : vector<8x128xf32>, vector<128x128xf32>, vector<8x128xf32> -> vector<8x128xf32>
    %c2_47 = arith.constant 2 : index
    %c0_48 = arith.constant 0 : index
    %63 = vector.load %arg13[%c2_47, %c0_48] : memref<3x128xf32, #tpu.memory_space<vmem>>, vector<1x128xf32>
    %64 = vector.broadcast %63 : vector<1x128xf32> to vector<8x128xf32>
    %65 = arith.addf %62, %64 : vector<8x128xf32>
    %66 = arith.mulf %65, %65 : vector<8x128xf32>
    %cst_49 = arith.constant dense<0.000000e+00> : vector<8xf32>
    %67 = vector.multi_reduction <add>, %66, %cst_49 [1] : vector<8x128xf32> to vector<8xf32>
    %68 = vector.shape_cast %67 : vector<8xf32> to vector<8x1xf32>
    %cst_50 = arith.constant 1.000000e-24 : f32
    %69 = vector.broadcast %cst_50 : f32 to vector<8x1xf32>
    %70 = arith.maximumf %68, %69 : vector<8x1xf32>
    %71 = math.rsqrt %70 : vector<8x1xf32>
    %72 = vector.broadcast %71 : vector<8x1xf32> to vector<8x128xf32>
    %73 = arith.mulf %65, %72 : vector<8x128xf32>
    %74 = tpu.iota {dimensions = array<i32: 1>} : vector<8x128xi32>
    %75 = arith.mulf %29, %73 : vector<8x128xf32>
    %cst_51 = arith.constant dense<0.000000e+00> : vector<8xf32>
    %76 = vector.multi_reduction <add>, %75, %cst_51 [1] : vector<8x128xf32> to vector<8xf32>
    %77 = vector.shape_cast %76 : vector<8xf32> to vector<8x1xf32>
    %c0_52 = arith.constant 0 : index
    %c0_53 = arith.constant 0 : index
    %78 = vector.load %arg7[%c0_52, %c0_53] : memref<128x128xf32, #tpu.memory_space<vmem>>, vector<128x128xf32>
    %cst_54 = arith.constant dense<0.000000e+00> : vector<8x128xf32>
    %79 = tpu.matmul %29, %78, %cst_54 {dimension_numbers = #tpu.dot_dimension_numbers<[1], [1], [0], [0], [0, 0, 1, 0], [], []>} : vector<8x128xf32>, vector<128x128xf32>, vector<8x128xf32> -> vector<8x128xf32>
    %c0_i32 = arith.constant 0 : i32
    %80 = vector.broadcast %c0_i32 : i32 to vector<8x128xi32>
    %81 = arith.cmpi eq, %74, %80 : vector<8x128xi32>
    %82 = vector.shape_cast %77 : vector<8x1xf32> to vector<8x1xf32>
    %83 = vector.broadcast %82 : vector<8x1xf32> to vector<8x128xf32>
    %84 = arith.select %81, %83, %79 : vector<8x128xi1>, vector<8x128xf32>
    %cst_55 = arith.constant 14.2857141 : f32
    %85 = vector.broadcast %cst_55 : f32 to vector<8x128xf32>
    %86 = arith.mulf %84, %85 : vector<8x128xf32>
    %c0_56 = arith.constant 0 : index
    %c0_57 = arith.constant 0 : index
    %87 = vector.load %arg10[%c0_56, %c0_57] : memref<8x128xf32, #tpu.memory_space<vmem>>, vector<8x128xf32>
    tpu.vector_store %arg10[%c0_56, %c0_57], %86 {strides = array<i32>} : memref<8x128xf32, #tpu.memory_space<vmem>>, vector<8x128xf32>,
    %c0_58 = arith.constant 0 : index
    %c0_59 = arith.constant 0 : index
    %88 = vector.load %arg8[%c0_58, %c0_59] : memref<8x128xf32, #tpu.memory_space<vmem>>, vector<8x128xf32>
    %89 = arith.mulf %28, %88 : vector<8x128xf32>
    %cst_60 = arith.constant dense<0.000000e+00> : vector<8xf32>
    %90 = vector.multi_reduction <add>, %89, %cst_60 [1] : vector<8x128xf32> to vector<8xf32>
    %91 = vector.shape_cast %90 : vector<8xf32> to vector<8x1xf32>
    %c0_61 = arith.constant 0 : index
    %c0_62 = arith.constant 0 : index
    %92 = vector.load %arg9[%c0_61, %c0_62] : memref<128x128xf32, #tpu.memory_space<vmem>>, vector<128x128xf32>
    %cst_63 = arith.constant dense<0.000000e+00> : vector<8x128xf32>
    %93 = tpu.matmul %28, %92, %cst_63 {dimension_numbers = #tpu.dot_dimension_numbers<[1], [1], [0], [0], [0, 0, 1, 0], [], []>} : vector<8x128xf32>, vector<128x128xf32>, vector<8x128xf32> -> vector<8x128xf32>
    %c0_i32_64 = arith.constant 0 : i32
    %94 = vector.broadcast %c0_i32_64 : i32 to vector<8x128xi32>
    %95 = arith.cmpi eq, %74, %94 : vector<8x128xi32>
    %96 = vector.shape_cast %91 : vector<8x1xf32> to vector<8x1xf32>
    %97 = vector.broadcast %96 : vector<8x1xf32> to vector<8x128xf32>
    %98 = arith.select %95, %97, %93 : vector<8x128xi1>, vector<8x128xf32>
    %c0_65 = arith.constant 0 : index
    %c0_66 = arith.constant 0 : index
    %99 = vector.load %arg11[%c0_65, %c0_66] : memref<8x128xf32, #tpu.memory_space<vmem>>, vector<8x128xf32>
    tpu.vector_store %arg11[%c0_65, %c0_66], %98 {strides = array<i32>} : memref<8x128xf32, #tpu.memory_space<vmem>>, vector<8x128xf32>,
    %c0_67 = arith.constant 0 : index
    %c0_68 = arith.constant 0 : index
    %100 = vector.load %arg7[%c0_67, %c0_68] : memref<128x128xf32, #tpu.memory_space<vmem>>, vector<128x128xf32>
    %c0_69 = arith.constant 0 : index
    %c0_70 = arith.constant 0 : index
    %101 = vector.load %arg14[%c0_69, %c0_70] : memref<128x128xf32, #tpu.memory_space<vmem>>, vector<128x128xf32>
    tpu.vector_store %arg14[%c0_69, %c0_70], %100 {strides = array<i32>} : memref<128x128xf32, #tpu.memory_space<vmem>>, vector<128x128xf32>,
    %c0_71 = arith.constant 0 : index
    %102 = memref.load %arg2[%c0_71] : memref<4xi32, #tpu.memory_space<smem>>
    %c0_72 = arith.constant 0 : index
    %103 = memref.load %arg15[%c0_72] : memref<4xi32, #tpu.memory_space<smem>>
    memref.store %102, %arg15[%c0_72] : memref<4xi32, #tpu.memory_space<smem>>
    %c1_73 = arith.constant 1 : index
    %104 = memref.load %arg2[%c1_73] : memref<4xi32, #tpu.memory_space<smem>>
    %c1_74 = arith.constant 1 : index
    %105 = memref.load %arg15[%c1_74] : memref<4xi32, #tpu.memory_space<smem>>
    memref.store %104, %arg15[%c1_74] : memref<4xi32, #tpu.memory_space<smem>>
    %c2_75 = arith.constant 2 : index
    %106 = memref.load %arg2[%c2_75] : memref<4xi32, #tpu.memory_space<smem>>
    %c2_76 = arith.constant 2 : index
    %107 = memref.load %arg15[%c2_76] : memref<4xi32, #tpu.memory_space<smem>>
    memref.store %106, %arg15[%c2_76] : memref<4xi32, #tpu.memory_space<smem>>
    %c3 = arith.constant 3 : index
    %108 = memref.load %arg2[%c3] : memref<4xi32, #tpu.memory_space<smem>>
    %c3_77 = arith.constant 3 : index
    %109 = memref.load %arg15[%c3_77] : memref<4xi32, #tpu.memory_space<smem>>
    memref.store %108, %arg15[%c3_77] : memref<4xi32, #tpu.memory_space<smem>>
    %c0_78 = arith.constant 0 : index
    %110 = memref.load %arg1[%c0_78] : memref<8xi32, #tpu.memory_space<smem>>
    %111 = arith.index_cast %110 : i32 to index
    %112 = memref.load %arg15[%111] : memref<4xi32, #tpu.memory_space<smem>>
    %113 = vector.extract_strided_slice %73 {offsets = [0, 0], sizes = [1, 128], strides = [1, 1]} : vector<8x128xf32> to vector<1x128xf32>
    %c1_i32 = arith.constant 1 : i32
    %114 = arith.addi %112, %c1_i32 : i32
    %115 = arith.index_cast %114 : i32 to index
    %c0_79 = arith.constant 0 : index
    %116 = vector.load %arg14[%115, %c0_79] : memref<128x128xf32, #tpu.memory_space<vmem>>, vector<1x128xf32>
    tpu.vector_store %arg14[%115, %c0_79], %113 {strides = array<i32>} : memref<128x128xf32, #tpu.memory_space<vmem>>, vector<1x128xf32>,
    %c12_i32 = arith.constant 12 : i32
    %117 = arith.muli %110, %c12_i32 : i32
    %c1_i32_80 = arith.constant 1 : i32
    %118 = arith.addi %112, %c1_i32_80 : i32
    %119 = arith.subi %118, %117 : i32
    %c12_i32_81 = arith.constant 12 : i32
    %120 = arith.cmpi sge, %119, %c12_i32_81 : i32
    %121 = arith.select %120, %117, %118 : i32
    %122 = arith.index_cast %110 : i32 to index
    %123 = memref.load %arg15[%122] : memref<4xi32, #tpu.memory_space<smem>>
    memref.store %121, %arg15[%122] : memref<4xi32, #tpu.memory_space<smem>>
    %c1_82 = arith.constant 1 : index
    %124 = memref.load %arg1[%c1_82] : memref<8xi32, #tpu.memory_space<smem>>
    %125 = arith.index_cast %124 : i32 to index
    %126 = memref.load %arg15[%125] : memref<4xi32, #tpu.memory_space<smem>>
    %127 = vector.extract_strided_slice %73 {offsets = [1, 0], sizes = [1, 128], strides = [1, 1]} : vector<8x128xf32> to vector<1x128xf32>
    %c1_i32_83 = arith.constant 1 : i32
    %128 = arith.addi %126, %c1_i32_83 : i32
    %129 = arith.index_cast %128 : i32 to index
    %c0_84 = arith.constant 0 : index
    %130 = vector.load %arg14[%129, %c0_84] : memref<128x128xf32, #tpu.memory_space<vmem>>, vector<1x128xf32>
    tpu.vector_store %arg14[%129, %c0_84], %127 {strides = array<i32>} : memref<128x128xf32, #tpu.memory_space<vmem>>, vector<1x128xf32>,
    %c12_i32_85 = arith.constant 12 : i32
    %131 = arith.muli %124, %c12_i32_85 : i32
    %c1_i32_86 = arith.constant 1 : i32
    %132 = arith.addi %126, %c1_i32_86 : i32
    %133 = arith.subi %132, %131 : i32
    %c12_i32_87 = arith.constant 12 : i32
    %134 = arith.cmpi sge, %133, %c12_i32_87 : i32
    %135 = arith.select %134, %131, %132 : i32
    %136 = arith.index_cast %124 : i32 to index
    %137 = memref.load %arg15[%136] : memref<4xi32, #tpu.memory_space<smem>>
    memref.store %135, %arg15[%136] : memref<4xi32, #tpu.memory_space<smem>>
    %c2_88 = arith.constant 2 : index
    %138 = memref.load %arg1[%c2_88] : memref<8xi32, #tpu.memory_space<smem>>
    %139 = arith.index_cast %138 : i32 to index
    %140 = memref.load %arg15[%139] : memref<4xi32, #tpu.memory_space<smem>>
    %141 = vector.extract_strided_slice %73 {offsets = [2, 0], sizes = [1, 128], strides = [1, 1]} : vector<8x128xf32> to vector<1x128xf32>
    %c1_i32_89 = arith.constant 1 : i32
    %142 = arith.addi %140, %c1_i32_89 : i32
    %143 = arith.index_cast %142 : i32 to index
    %c0_90 = arith.constant 0 : index
    %144 = vector.load %arg14[%143, %c0_90] : memref<128x128xf32, #tpu.memory_space<vmem>>, vector<1x128xf32>
    tpu.vector_store %arg14[%143, %c0_90], %141 {strides = array<i32>} : memref<128x128xf32, #tpu.memory_space<vmem>>, vector<1x128xf32>,
    %c12_i32_91 = arith.constant 12 : i32
    %145 = arith.muli %138, %c12_i32_91 : i32
    %c1_i32_92 = arith.constant 1 : i32
    %146 = arith.addi %140, %c1_i32_92 : i32
    %147 = arith.subi %146, %145 : i32
    %c12_i32_93 = arith.constant 12 : i32
    %148 = arith.cmpi sge, %147, %c12_i32_93 : i32
    %149 = arith.select %148, %145, %146 : i32
    %150 = arith.index_cast %138 : i32 to index
    %151 = memref.load %arg15[%150] : memref<4xi32, #tpu.memory_space<smem>>
    memref.store %149, %arg15[%150] : memref<4xi32, #tpu.memory_space<smem>>
    %c3_94 = arith.constant 3 : index
    %152 = memref.load %arg1[%c3_94] : memref<8xi32, #tpu.memory_space<smem>>
    %153 = arith.index_cast %152 : i32 to index
    %154 = memref.load %arg15[%153] : memref<4xi32, #tpu.memory_space<smem>>
    %155 = vector.extract_strided_slice %73 {offsets = [3, 0], sizes = [1, 128], strides = [1, 1]} : vector<8x128xf32> to vector<1x128xf32>
    %c1_i32_95 = arith.constant 1 : i32
    %156 = arith.addi %154, %c1_i32_95 : i32
    %157 = arith.index_cast %156 : i32 to index
    %c0_96 = arith.constant 0 : index
    %158 = vector.load %arg14[%157, %c0_96] : memref<128x128xf32, #tpu.memory_space<vmem>>, vector<1x128xf32>
    tpu.vector_store %arg14[%157, %c0_96], %155 {strides = array<i32>} : memref<128x128xf32, #tpu.memory_space<vmem>>, vector<1x128xf32>,
    %c12_i32_97 = arith.constant 12 : i32
    %159 = arith.muli %152, %c12_i32_97 : i32
    %c1_i32_98 = arith.constant 1 : i32
    %160 = arith.addi %154, %c1_i32_98 : i32
    %161 = arith.subi %160, %159 : i32
    %c12_i32_99 = arith.constant 12 : i32
    %162 = arith.cmpi sge, %161, %c12_i32_99 : i32
    %163 = arith.select %162, %159, %160 : i32
    %164 = arith.index_cast %152 : i32 to index
    %165 = memref.load %arg15[%164] : memref<4xi32, #tpu.memory_space<smem>>
    memref.store %163, %arg15[%164] : memref<4xi32, #tpu.memory_space<smem>>
    %c4 = arith.constant 4 : index
    %166 = memref.load %arg1[%c4] : memref<8xi32, #tpu.memory_space<smem>>
    %167 = arith.index_cast %166 : i32 to index
    %168 = memref.load %arg15[%167] : memref<4xi32, #tpu.memory_space<smem>>
    %169 = vector.extract_strided_slice %73 {offsets = [4, 0], sizes = [1, 128], strides = [1, 1]} : vector<8x128xf32> to vector<1x128xf32>
    %c1_i32_100 = arith.constant 1 : i32
    %170 = arith.addi %168, %c1_i32_100 : i32
    %171 = arith.index_cast %170 : i32 to index
    %c0_101 = arith.constant 0 : index
    %172 = vector.load %arg14[%171, %c0_101] : memref<128x128xf32, #tpu.memory_space<vmem>>, vector<1x128xf32>
    tpu.vector_store %arg14[%171, %c0_101], %169 {strides = array<i32>} : memref<128x128xf32, #tpu.memory_space<vmem>>, vector<1x128xf32>,
    %c12_i32_102 = arith.constant 12 : i32
    %173 = arith.muli %166, %c12_i32_102 : i32
    %c1_i32_103 = arith.constant 1 : i32
    %174 = arith.addi %168, %c1_i32_103 : i32
    %175 = arith.subi %174, %173 : i32
    %c12_i32_104 = arith.constant 12 : i32
    %176 = arith.cmpi sge, %175, %c12_i32_104 : i32
    %177 = arith.select %176, %173, %174 : i32
    %178 = arith.index_cast %166 : i32 to index
    %179 = memref.load %arg15[%178] : memref<4xi32, #tpu.memory_space<smem>>
    memref.store %177, %arg15[%178] : memref<4xi32, #tpu.memory_space<smem>>
    %c5 = arith.constant 5 : index
    %180 = memref.load %arg1[%c5] : memref<8xi32, #tpu.memory_space<smem>>
    %181 = arith.index_cast %180 : i32 to index
    %182 = memref.load %arg15[%181] : memref<4xi32, #tpu.memory_space<smem>>
    %183 = vector.extract_strided_slice %73 {offsets = [5, 0], sizes = [1, 128], strides = [1, 1]} : vector<8x128xf32> to vector<1x128xf32>
    %c1_i32_105 = arith.constant 1 : i32
    %184 = arith.addi %182, %c1_i32_105 : i32
    %185 = arith.index_cast %184 : i32 to index
    %c0_106 = arith.constant 0 : index
    %186 = vector.load %arg14[%185, %c0_106] : memref<128x128xf32, #tpu.memory_space<vmem>>, vector<1x128xf32>
    tpu.vector_store %arg14[%185, %c0_106], %183 {strides = array<i32>} : memref<128x128xf32, #tpu.memory_space<vmem>>, vector<1x128xf32>,
    %c12_i32_107 = arith.constant 12 : i32
    %187 = arith.muli %180, %c12_i32_107 : i32
    %c1_i32_108 = arith.constant 1 : i32
    %188 = arith.addi %182, %c1_i32_108 : i32
    %189 = arith.subi %188, %187 : i32
    %c12_i32_109 = arith.constant 12 : i32
    %190 = arith.cmpi sge, %189, %c12_i32_109 : i32
    %191 = arith.select %190, %187, %188 : i32
    %192 = arith.index_cast %180 : i32 to index
    %193 = memref.load %arg15[%192] : memref<4xi32, #tpu.memory_space<smem>>
    memref.store %191, %arg15[%192] : memref<4xi32, #tpu.memory_space<smem>>
    %c6 = arith.constant 6 : index
    %194 = memref.load %arg1[%c6] : memref<8xi32, #tpu.memory_space<smem>>
    %195 = arith.index_cast %194 : i32 to index
    %196 = memref.load %arg15[%195] : memref<4xi32, #tpu.memory_space<smem>>
    %197 = vector.extract_strided_slice %73 {offsets = [6, 0], sizes = [1, 128], strides = [1, 1]} : vector<8x128xf32> to vector<1x128xf32>
    %c1_i32_110 = arith.constant 1 : i32
    %198 = arith.addi %196, %c1_i32_110 : i32
    %199 = arith.index_cast %198 : i32 to index
    %c0_111 = arith.constant 0 : index
    %200 = vector.load %arg14[%199, %c0_111] : memref<128x128xf32, #tpu.memory_space<vmem>>, vector<1x128xf32>
    tpu.vector_store %arg14[%199, %c0_111], %197 {strides = array<i32>} : memref<128x128xf32, #tpu.memory_space<vmem>>, vector<1x128xf32>,
    %c12_i32_112 = arith.constant 12 : i32
    %201 = arith.muli %194, %c12_i32_112 : i32
    %c1_i32_113 = arith.constant 1 : i32
    %202 = arith.addi %196, %c1_i32_113 : i32
    %203 = arith.subi %202, %201 : i32
    %c12_i32_114 = arith.constant 12 : i32
    %204 = arith.cmpi sge, %203, %c12_i32_114 : i32
    %205 = arith.select %204, %201, %202 : i32
    %206 = arith.index_cast %194 : i32 to index
    %207 = memref.load %arg15[%206] : memref<4xi32, #tpu.memory_space<smem>>
    memref.store %205, %arg15[%206] : memref<4xi32, #tpu.memory_space<smem>>
    %c7 = arith.constant 7 : index
    %208 = memref.load %arg1[%c7] : memref<8xi32, #tpu.memory_space<smem>>
    %209 = arith.index_cast %208 : i32 to index
    %210 = memref.load %arg15[%209] : memref<4xi32, #tpu.memory_space<smem>>
    %211 = vector.extract_strided_slice %73 {offsets = [7, 0], sizes = [1, 128], strides = [1, 1]} : vector<8x128xf32> to vector<1x128xf32>
    %c1_i32_115 = arith.constant 1 : i32
    %212 = arith.addi %210, %c1_i32_115 : i32
    %213 = arith.index_cast %212 : i32 to index
    %c0_116 = arith.constant 0 : index
    %214 = vector.load %arg14[%213, %c0_116] : memref<128x128xf32, #tpu.memory_space<vmem>>, vector<1x128xf32>
    tpu.vector_store %arg14[%213, %c0_116], %211 {strides = array<i32>} : memref<128x128xf32, #tpu.memory_space<vmem>>, vector<1x128xf32>,
    %c12_i32_117 = arith.constant 12 : i32
    %215 = arith.muli %208, %c12_i32_117 : i32
    %c1_i32_118 = arith.constant 1 : i32
    %216 = arith.addi %210, %c1_i32_118 : i32
    %217 = arith.subi %216, %215 : i32
    %c12_i32_119 = arith.constant 12 : i32
    %218 = arith.cmpi sge, %217, %c12_i32_119 : i32
    %219 = arith.select %218, %215, %216 : i32
    %220 = arith.index_cast %208 : i32 to index
    %221 = memref.load %arg15[%220] : memref<4xi32, #tpu.memory_space<smem>>
    memref.store %219, %arg15[%220] : memref<4xi32, #tpu.memory_space<smem>>
    return
  }
}

</mosaic_0001>

<llo_original>
// kernel: moco_forward.1
$region0: #{moco_forward.1}
  #allocation0 [shape = 'u32[]', space=smem, size = 0x4, offset = 0x4, fixed_abs, tag = 'smem constant byte address 0x4 - core index']
  #allocation1 [shape = 'u32[144,128]{1,0:T(1,128)}', space=vmem, size = 0x12000, scoped, tag = 'internal scratch']
  #allocation2 [shape = 's32[4]{0:T(128)}', space=smem, size = 0x200, scoped, tag = 'scratch operand']
  %s0 = inlined_call_operand.vmem [shape: f32[24,256], index: 0, kind: input, shape index: {}]
  %s1 = inlined_call_operand.vmem [shape: s32[8], index: 1, kind: input, shape index: {}]
  %s2 = inlined_call_operand.vmem [shape: s32[4], index: 2, kind: input, shape index: {}]
  %s3 = inlined_call_operand.vmem [shape: f32[512,128], index: 3, kind: input, shape index: {}]
  %s4 = inlined_call_operand.vmem [shape: f32[3,128], index: 4, kind: input, shape index: {}]
  %s5 = inlined_call_operand.vmem [shape: f32[512,128], index: 5, kind: input, shape index: {}, may-alias: {5,12}]
  %s6 = inlined_call_operand.vmem [shape: f32[3,128], index: 6, kind: input, shape index: {}, may-alias: {6,13}]
  %s7 = inlined_call_operand.vmem [shape: f32[128,128], index: 7, kind: input, shape index: {}, may-alias: {7,14}]
  %s8 = inlined_call_operand.vmem [shape: f32[8,128], index: 8, kind: input, shape index: {}]
  %s9 = inlined_call_operand.vmem [shape: f32[128,128], index: 9, kind: input, shape index: {}]
  %s10 = inlined_call_operand.hbm [shape: f32[8,128], index: 10, kind: output, shape index: {0}]
  %s11 = inlined_call_operand.hbm [shape: f32[8,128], index: 11, kind: output, shape index: {1}]
  %s12 = inlined_call_operand.vmem [shape: f32[512,128], index: 12, kind: output, shape index: {2}, may-alias: {5,12}]
  %s13 = inlined_call_operand.vmem [shape: f32[3,128], index: 13, kind: output, shape index: {3}, may-alias: {6,13}]
  %s14 = inlined_call_operand.vmem [shape: f32[128,128], index: 14, kind: output, shape index: {4}, may-alias: {7,14}]
  %15 = xla_tuple %s10, %s11, %s12, %s13, %s14
  %s16 = sld [smem:[#allocation0]]
  $region90: #{moco_forward.1} parent=0
    _
  %s18 = ssub.s32 1, %s16
  %s19 = scalar_select 0, %s18, %s16
  $region1: #{moco_forward.1} parent=0
    #allocation3 [shape = 'u8[512]{0}', space=smem, size = 0x200, scoped, tag = 'input window, operand 1, single buffered']
    #allocation4 [shape = 's32[1]{0}', space=sflag, size = 0x4, scoped, tag = 'scoped memory for moco_forward.1']
    #allocation5 [shape = 's32[1]{0}', space=sflag, size = 0x4, scoped, tag = 'scoped memory for moco_forward.1']
    #allocation6 [shape = 'u8[512]{0}', space=smem, size = 0x200, scoped, tag = 'input window, operand 2, single buffered']
    #allocation7 [shape = 's32[1]{0}', space=sflag, size = 0x4, scoped, tag = 'scoped memory for moco_forward.1']
    #allocation8 [shape = 'u8[4096]{0}', space=vmem, size = 0x1000, scoped, tag = 'output window, operand 0, single buffered']
    #allocation9 [shape = 'u8[4096]{0}', space=vmem, size = 0x1000, scoped, tag = 'output window, operand 1, single buffered']
    #allocation10 [shape = 's32[1]{0}', space=sflag, size = 0x4, scoped, tag = 'scoped memory for moco_forward.1']
    %20 = vsyncpa [#allocation5], 0
    %21 = vsyncpa [#allocation7], 0
    %22 = vsyncpa [#allocation4], 0
    %23 = vsyncpa [#allocation10], 0
    // Predicated region
    $region2: #{moco_forward.1} parent=1 // pred_check
      _
    $region3: #{moco_forward.1} parent=1 // pred_check_branch
      %25 = sbr.rel (0) target = $region5
    $region4: #{moco_forward.1} parent=1 // pred_region
      _
    $region5: #{moco_forward.1} parent=1 // pred_fallthru
      _
    // Predicated region
    $region6: #{moco_forward.1} parent=1 // pred_check
      _
    $region7: #{moco_forward.1} parent=1 // pred_check_branch
      %27 = sbr.rel (0) target = $region9
    $region8: #{moco_forward.1} parent=1 // pred_region
      %s29 = ssub.s32 16, 16
      %30 = vsyncadd [#allocation5], %s29
      %s32 = sshll.u32 %s1, 4
      %s33 = int_to_ptr.vmem [resolvable:$true] %s32
      %35 = dma.vmem_to_smem %s33, 16, [#allocation3], [#allocation5]
    $region9: #{moco_forward.1} parent=1 // pred_fallthru
      _
    // Predicated region
    $region10: #{moco_forward.1} parent=1 // pred_check
      _
    $region11: #{moco_forward.1} parent=1 // pred_check_branch
      %37 = sbr.rel (0) target = $region13
    $region12: #{moco_forward.1} parent=1 // pred_region
      %s39 = ssub.s32 16, 16
      %40 = vsyncadd [#allocation7], %s39
      %s42 = sshll.u32 %s2, 4
      %s43 = int_to_ptr.vmem [resolvable:$true] %s42
      %45 = dma.vmem_to_smem %s43, 16, [#allocation6], [#allocation7]
    $region13: #{moco_forward.1} parent=1 // pred_fallthru
      _
    // Predicated region
    $region14: #{moco_forward.1} parent=1 // pred_check
      _
    $region15: #{moco_forward.1} parent=1 // pred_check_branch
      %47 = sbr.rel (0) target = $region17
    $region16: #{moco_forward.1} parent=1 // pred_region
      _
    $region17: #{moco_forward.1} parent=1 // pred_fallthru
      _
    // Predicated region
    $region18: #{moco_forward.1} parent=1 // pred_check
      _
    $region19: #{moco_forward.1} parent=1 // pred_check_branch
      %49 = sbr.rel (0) target = $region21
    $region20: #{moco_forward.1} parent=1 // pred_region
      _
    $region21: #{moco_forward.1} parent=1 // pred_fallthru
      _
    // Predicated region
    $region22: #{moco_forward.1} parent=1 // pred_check
      _
    $region23: #{moco_forward.1} parent=1 // pred_check_branch
      %51 = sbr.rel (0) target = $region25
    $region24: #{moco_forward.1} parent=1 // pred_region
      _
    $region25: #{moco_forward.1} parent=1 // pred_fallthru
      _
    // Predicated region
    $region26: #{moco_forward.1} parent=1 // pred_check
      _
    $region27: #{moco_forward.1} parent=1 // pred_check_branch
      %53 = sbr.rel (0) target = $region29
    $region28: #{moco_forward.1} parent=1 // pred_region
      _
    $region29: #{moco_forward.1} parent=1 // pred_fallthru
      _
    // Predicated region
    $region30: #{moco_forward.1} parent=1 // pred_check
      _
    $region31: #{moco_forward.1} parent=1 // pred_check_branch
      %55 = sbr.rel (0) target = $region33
    $region32: #{moco_forward.1} parent=1 // pred_region
      _
    $region33: #{moco_forward.1} parent=1 // pred_fallthru
      _
    // Predicated region
    $region34: #{moco_forward.1} parent=1 // pred_check
      _
    $region35: #{moco_forward.1} parent=1 // pred_check_branch
      %57 = sbr.rel (0) target = $region37
    $region36: #{moco_forward.1} parent=1 // pred_region
      _
    $region37: #{moco_forward.1} parent=1 // pred_fallthru
      _
    // Predicated region
    $region38: #{moco_forward.1} parent=1 // pred_check
      _
    $region39: #{moco_forward.1} parent=1 // pred_check_branch
      %59 = sbr.rel (0) target = $region41
    $region40: #{moco_forward.1} parent=1 // pred_region
      _
    $region41: #{moco_forward.1} parent=1 // pred_fallthru
      _
    // Predicated region
    $region42: #{moco_forward.1} parent=1 // pred_check
      _
    $region43: #{moco_forward.1} parent=1 // pred_check_branch
      %61 = sbr.rel (0) target = $region45
    $region44: #{moco_forward.1} parent=1 // pred_region
      %62 = dma.done [#allocation5], 16
    $region45: #{moco_forward.1} parent=1 // pred_fallthru
      _
    // Predicated region
    $region46: #{moco_forward.1} parent=1 // pred_check
      _
    $region47: #{moco_forward.1} parent=1 // pred_check_branch
      %64 = sbr.rel (0) target = $region49
    $region48: #{moco_forward.1} parent=1 // pred_region
      %65 = dma.done [#allocation7], 16
    $region49: #{moco_forward.1} parent=1 // pred_fallthru
      _
    %66 = sfence
    %v67 = vld [vmem:[%s0] sm:$0xff]
    %v68 = vld [vmem:[%s0 + $0x8] sm:$0xff]
    %v69 = vld [vmem:[%s0 + $0x10] sm:$0xff]
    %v70 = vld [vmem:[%s0 + $0x18] sm:$0xff]
    %v71 = vld [vmem:[%s3] sm:$0xff]
    %v72 = vld [vmem:[%s3 + $0x8] sm:$0xff]
    %v73 = vld [vmem:[%s3 + $0x10] sm:$0xff]
    %v74 = vld [vmem:[%s3 + $0x18] sm:$0xff]
    %v75 = vld [vmem:[%s3 + $0x20] sm:$0xff]
    %v76 = vld [vmem:[%s3 + $0x28] sm:$0xff]
    %v77 = vld [vmem:[%s3 + $0x30] sm:$0xff]
    %v78 = vld [vmem:[%s3 + $0x38] sm:$0xff]
    %v79 = vld [vmem:[%s3 + $0x40] sm:$0xff]
    %v80 = vld [vmem:[%s3 + $0x48] sm:$0xff]
    %v81 = vld [vmem:[%s3 + $0x50] sm:$0xff]
    %v82 = vld [vmem:[%s3 + $0x58] sm:$0xff]
    %v83 = vld [vmem:[%s3 + $0x60] sm:$0xff]
    %v84 = vld [vmem:[%s3 + $0x68] sm:$0xff]
    %v85 = vld [vmem:[%s3 + $0x70] sm:$0xff]
    %v86 = vld [vmem:[%s3 + $0x78] sm:$0xff]
    %v87 = vld [vmem:[%s3 + $0x80] sm:$0xff]
    %v88 = vld [vmem:[%s3 + $0x88] sm:$0xff]
    %v89 = vld [vmem:[%s3 + $0x90] sm:$0xff]
    %v90 = vld [vmem:[%s3 + $0x98] sm:$0xff]
    %v91 = vld [vmem:[%s3 + $0xa0] sm:$0xff]
    %v92 = vld [vmem:[%s3 + $0xa8] sm:$0xff]
    %v93 = vld [vmem:[%s3 + $0xb0] sm:$0xff]
    %v94 = vld [vmem:[%s3 + $0xb8] sm:$0xff]
    %v95 = vld [vmem:[%s3 + $0xc0] sm:$0xff]
    %v96 = vld [vmem:[%s3 + $0xc8] sm:$0xff]
    %v97 = vld [vmem:[%s3 + $0xd0] sm:$0xff]
    %v98 = vld [vmem:[%s3 + $0xd8] sm:$0xff]
    %v99 = vld [vmem:[%s3 + $0xe0] sm:$0xff]
    %v100 = vld [vmem:[%s3 + $0xe8] sm:$0xff]
    %v101 = vld [vmem:[%s3 + $0xf0] sm:$0xff]
    %v102 = vld [vmem:[%s3 + $0xf8] sm:$0xff]
    %v103 = vld [vmem:[%s4] sm:$0x1]
    %v104 = vlaneseq
    %v105 = vshrl.u32 %v104, 7
    %v106 = vsub.s32 0, %v105
    %v107 = vrot.slane %v103, %v106
    %108 = vmatprep.subr.mxu0 0.0
    %109 = vmatpush1.msra.mxu0 %v86
    %110 = vmatprep.subr.mxu0 0.0
    %111 = vmatpush1.msra.mxu0 %v85
    %112 = vmatprep.subr.mxu0 0.0
    %113 = vmatpush1.msra.mxu0 %v84
    %114 = vmatprep.subr.mxu0 0.0
    %115 = vmatpush1.msra.mxu0 %v83
    %116 = vmatprep.subr.mxu0 0.0
    %117 = vmatpush1.msra.mxu0 %v82
    %118 = vmatprep.subr.mxu0 0.0
    %119 = vmatpush1.msra.mxu0 %v81
    %120 = vmatprep.subr.mxu0 0.0
    %121 = vmatpush1.msra.mxu0 %v80
    %122 = vmatprep.subr.mxu0 0.0
    %123 = vmatpush1.msra.mxu0 %v79
    %124 = vmatprep.subr.mxu0 0.0
    %125 = vmatpush1.msra.mxu0 %v78
    %126 = vmatprep.subr.mxu0 0.0
    %127 = vmatpush1.msra.mxu0 %v77
    %128 = vmatprep.subr.mxu0 0.0
    %129 = vmatpush1.msra.mxu0 %v76
    %130 = vmatprep.subr.mxu0 0.0
    %131 = vmatpush1.msra.mxu0 %v75
    %132 = vmatprep.subr.mxu0 0.0
    %133 = vmatpush1.msra.mxu0 %v74
    %134 = vmatprep.subr.mxu0 0.0
    %135 = vmatpush1.msra.mxu0 %v73
    %136 = vmatprep.subr.mxu0 0.0
    %137 = vmatpush1.msra.mxu0 %v72
    %138 = vmatprep.subr.mxu0 0.0
    %139 = vmatpush1.msra.mxu0 %v71
    %140 = vmatprep.subr.mxu0 0.0
    %141 = vmatpush2.msra.mxu0 %v102
    %142 = vmatprep.subr.mxu0 0.0
    %143 = vmatpush2.msra.mxu0 %v101
    %144 = vmatprep.subr.mxu0 0.0
    %145 = vmatpush2.msra.mxu0 %v100
    %146 = vmatprep.subr.mxu0 0.0
    %147 = vmatpush2.msra.mxu0 %v99
    %148 = vmatprep.subr.mxu0 0.0
    %149 = vmatpush2.msra.mxu0 %v98
    %150 = vmatprep.subr.mxu0 0.0
    %151 = vmatpush2.msra.mxu0 %v97
    %152 = vmatprep.subr.mxu0 0.0
    %153 = vmatpush2.msra.mxu0 %v96
    %154 = vmatprep.subr.mxu0 0.0
    %155 = vmatpush2.msra.mxu0 %v95
    %156 = vmatprep.subr.mxu0 0.0
    %157 = vmatpush2.msra.mxu0 %v94
    %158 = vmatprep.subr.mxu0 0.0
    %159 = vmatpush2.msra.mxu0 %v93
    %160 = vmatprep.subr.mxu0 0.0
    %161 = vmatpush2.msra.mxu0 %v92
    %162 = vmatprep.subr.mxu0 0.0
    %163 = vmatpush2.msra.mxu0 %v91
    %164 = vmatprep.subr.mxu0 0.0
    %165 = vmatpush2.msra.mxu0 %v90
    %166 = vmatprep.subr.mxu0 0.0
    %167 = vmatpush2.msra.mxu0 %v89
    %168 = vmatprep.subr.mxu0 0.0
    %169 = vmatpush2.msra.mxu0 %v88
    %170 = vmatprep.subr.mxu0 0.0
    %171 = vmatpush2.msra.mxu0 %v87
    %172 = vmatprep.mubr.f32.mxu0 %v68
    %173 = vmatmul.mubr.f32.gmra.mxu0 %v67
    %v174 = vpop.f32.mrf.mxu0
    %v175 = vadd.f32 %v107, %v174
    %v176 = vpop.f32.mrf.mxu0
    %177 = vmatprep.mubr.f32.mxu0 %v70
    %178 = vmatmul.mubr.f32.gmra.mxu0 %v69
    %v179 = vpop.f32.mrf.mxu0
    %v180 = vadd.f32 %v107, %v179
    %v181 = vpop.f32.mrf.mxu0
    %182 = vdwg.mxu0
    %v183 = vmax.f32 %v175, 0.0
    %v184 = vmax.f32 %v180, 0.0
    %v185 = vld [vmem:[%s3 + $0x100] sm:$0xff]
    %v186 = vld [vmem:[%s3 + $0x108] sm:$0xff]
    %v187 = vld [vmem:[%s3 + $0x110] sm:$0xff]
    %v188 = vld [vmem:[%s3 + $0x118] sm:$0xff]
    %v189 = vld [vmem:[%s3 + $0x120] sm:$0xff]
    %v190 = vld [vmem:[%s3 + $0x128] sm:$0xff]
    %v191 = vld [vmem:[%s3 + $0x130] sm:$0xff]
    %v192 = vld [vmem:[%s3 + $0x138] sm:$0xff]
    %v193 = vld [vmem:[%s3 + $0x140] sm:$0xff]
    %v194 = vld [vmem:[%s3 + $0x148] sm:$0xff]
    %v195 = vld [vmem:[%s3 + $0x150] sm:$0xff]
    %v196 = vld [vmem:[%s3 + $0x158] sm:$0xff]
    %v197 = vld [vmem:[%s3 + $0x160] sm:$0xff]
    %v198 = vld [vmem:[%s3 + $0x168] sm:$0xff]
    %v199 = vld [vmem:[%s3 + $0x170] sm:$0xff]
    %v200 = vld [vmem:[%s3 + $0x178] sm:$0xff]
    %v201 = vld [vmem:[%s4 + $0x1] sm:$0x1]
    %v202 = vlaneseq
    %v203 = vshrl.u32 %v202, 7
    %v204 = vsub.s32 0, %v203
    %v205 = vrot.slane %v201, %v204
    %206 = vmatprep.subr.mxu0 0.0
    %207 = vmatpush1.msra.mxu0 %v200
    %208 = vmatprep.subr.mxu0 0.0
    %209 = vmatpush1.msra.mxu0 %v199
    %210 = vmatprep.subr.mxu0 0.0
    %211 = vmatpush1.msra.mxu0 %v198
    %212 = vmatprep.subr.mxu0 0.0
    %213 = vmatpush1.msra.mxu0 %v197
    %214 = vmatprep.subr.mxu0 0.0
    %215 = vmatpush1.msra.mxu0 %v196
    %216 = vmatprep.subr.mxu0 0.0
    %217 = vmatpush1.msra.mxu0 %v195
    %218 = vmatprep.subr.mxu0 0.0
    %219 = vmatpush1.msra.mxu0 %v194
    %220 = vmatprep.subr.mxu0 0.0
    %221 = vmatpush1.msra.mxu0 %v193
    %222 = vmatprep.subr.mxu0 0.0
    %223 = vmatpush1.msra.mxu0 %v192
    %224 = vmatprep.subr.mxu0 0.0
    %225 = vmatpush1.msra.mxu0 %v191
    %226 = vmatprep.subr.mxu0 0.0
    %227 = vmatpush1.msra.mxu0 %v190
    %228 = vmatprep.subr.mxu0 0.0
    %229 = vmatpush1.msra.mxu0 %v189
    %230 = vmatprep.subr.mxu0 0.0
    %231 = vmatpush1.msra.mxu0 %v188
    %232 = vmatprep.subr.mxu0 0.0
    %233 = vmatpush1.msra.mxu0 %v187
    %234 = vmatprep.subr.mxu0 0.0
    %235 = vmatpush1.msra.mxu0 %v186
    %236 = vmatprep.subr.mxu0 0.0
    %237 = vmatpush1.msra.mxu0 %v185
    %238 = vmatprep.subr.mxu0 0.0
    %239 = vmatpush2.msra.mxu0 0.0
    %240 = vmatprep.subr.mxu0 0.0
    %241 = vmatpush2.msra.mxu0 0.0
    %242 = vmatprep.subr.mxu0 0.0
    %243 = vmatpush2.msra.mxu0 0.0
    %244 = vmatprep.subr.mxu0 0.0
    %245 = vmatpush2.msra.mxu0 0.0
    %246 = vmatprep.subr.mxu0 0.0
    %247 = vmatpush2.msra.mxu0 0.0
    %248 = vmatprep.subr.mxu0 0.0
    %249 = vmatpush2.msra.mxu0 0.0
    %250 = vmatprep.subr.mxu0 0.0
    %251 = vmatpush2.msra.mxu0 0.0
    %252 = vmatprep.subr.mxu0 0.0
    %253 = vmatpush2.msra.mxu0 0.0
    %254 = vmatprep.subr.mxu0 0.0
    %255 = vmatpush2.msra.mxu0 0.0
    %256 = vmatprep.subr.mxu0 0.0
    %257 = vmatpush2.msra.mxu0 0.0
    %258 = vmatprep.subr.mxu0 0.0
    %259 = vmatpush2.msra.mxu0 0.0
    %260 = vmatprep.subr.mxu0 0.0
    %261 = vmatpush2.msra.mxu0 0.0
    %262 = vmatprep.subr.mxu0 0.0
    %263 = vmatpush2.msra.mxu0 0.0
    %264 = vmatprep.subr.mxu0 0.0
    %265 = vmatpush2.msra.mxu0 0.0
    %266 = vmatprep.subr.mxu0 0.0
    %267 = vmatpush2.msra.mxu0 0.0
    %268 = vmatprep.subr.mxu0 0.0
    %269 = vmatpush2.msra.mxu0 0.0
    %270 = vmatprep.mubr.f32.mxu0 0.0
    %271 = vmatmul.mubr.f32.gmra.mxu0 %v183
    %v272 = vpop.f32.mrf.mxu0
    %v273 = vadd.f32 %v205, %v272
    %v274 = vpop.f32.mrf.mxu0
    %275 = vmatprep.mubr.f32.mxu0 0.0
    %276 = vmatmul.mubr.f32.gmra.mxu0 %v184
    %v277 = vpop.f32.mrf.mxu0
    %v278 = vadd.f32 %v205, %v277
    %v279 = vpop.f32.mrf.mxu0
    %280 = vdwg.mxu0
    %v281 = vmax.f32 %v273, 0.0
    %v282 = vmax.f32 %v278, 0.0
    %v283 = vld [vmem:[%s3 + $0x180] sm:$0xff]
    %v284 = vld [vmem:[%s3 + $0x188] sm:$0xff]
    %v285 = vld [vmem:[%s3 + $0x190] sm:$0xff]
    %v286 = vld [vmem:[%s3 + $0x198] sm:$0xff]
    %v287 = vld [vmem:[%s3 + $0x1a0] sm:$0xff]
    %v288 = vld [vmem:[%s3 + $0x1a8] sm:$0xff]
    %v289 = vld [vmem:[%s3 + $0x1b0] sm:$0xff]
    %v290 = vld [vmem:[%s3 + $0x1b8] sm:$0xff]
    %v291 = vld [vmem:[%s3 + $0x1c0] sm:$0xff]
    %v292 = vld [vmem:[%s3 + $0x1c8] sm:$0xff]
    %v293 = vld [vmem:[%s3 + $0x1d0] sm:$0xff]
    %v294 = vld [vmem:[%s3 + $0x1d8] sm:$0xff]
    %v295 = vld [vmem:[%s3 + $0x1e0] sm:$0xff]
    %v296 = vld [vmem:[%s3 + $0x1e8] sm:$0xff]
    %v297 = vld [vmem:[%s3 + $0x1f0] sm:$0xff]
    %v298 = vld [vmem:[%s3 + $0x1f8] sm:$0xff]
    %v299 = vld [vmem:[%s4 + $0x2] sm:$0x1]
    %v300 = vlaneseq
    %v301 = vshrl.u32 %v300, 7
    %v302 = vsub.s32 0, %v301
    %v303 = vrot.slane %v299, %v302
    %304 = vmatprep.subr.mxu0 0.0
    %305 = vmatpush1.msra.mxu0 %v298
    %306 = vmatprep.subr.mxu0 0.0
    %307 = vmatpush1.msra.mxu0 %v297
    %308 = vmatprep.subr.mxu0 0.0
    %309 = vmatpush1.msra.mxu0 %v296
    %310 = vmatprep.subr.mxu0 0.0
    %311 = vmatpush1.msra.mxu0 %v295
    %312 = vmatprep.subr.mxu0 0.0
    %313 = vmatpush1.msra.mxu0 %v294
    %314 = vmatprep.subr.mxu0 0.0
    %315 = vmatpush1.msra.mxu0 %v293
    %316 = vmatprep.subr.mxu0 0.0
    %317 = vmatpush1.msra.mxu0 %v292
    %318 = vmatprep.subr.mxu0 0.0
    %319 = vmatpush1.msra.mxu0 %v291
    %320 = vmatprep.subr.mxu0 0.0
    %321 = vmatpush1.msra.mxu0 %v290
    %322 = vmatprep.subr.mxu0 0.0
    %323 = vmatpush1.msra.mxu0 %v289
    %324 = vmatprep.subr.mxu0 0.0
    %325 = vmatpush1.msra.mxu0 %v288
    %326 = vmatprep.subr.mxu0 0.0
    %327 = vmatpush1.msra.mxu0 %v287
    %328 = vmatprep.subr.mxu0 0.0
    %329 = vmatpush1.msra.mxu0 %v286
    %330 = vmatprep.subr.mxu0 0.0
    %331 = vmatpush1.msra.mxu0 %v285
    %332 = vmatprep.subr.mxu0 0.0
    %333 = vmatpush1.msra.mxu0 %v284
    %334 = vmatprep.subr.mxu0 0.0
    %335 = vmatpush1.msra.mxu0 %v283
    %336 = vmatprep.subr.mxu0 0.0
    %337 = vmatpush2.msra.mxu0 0.0
    %338 = vmatprep.subr.mxu0 0.0
    %339 = vmatpush2.msra.mxu0 0.0
    %340 = vmatprep.subr.mxu0 0.0
    %341 = vmatpush2.msra.mxu0 0.0
    %342 = vmatprep.subr.mxu0 0.0
    %343 = vmatpush2.msra.mxu0 0.0
    %344 = vmatprep.subr.mxu0 0.0
    %345 = vmatpush2.msra.mxu0 0.0
    %346 = vmatprep.subr.mxu0 0.0
    %347 = vmatpush2.msra.mxu0 0.0
    %348 = vmatprep.subr.mxu0 0.0
    %349 = vmatpush2.msra.mxu0 0.0
    %350 = vmatprep.subr.mxu0 0.0
    %351 = vmatpush2.msra.mxu0 0.0
    %352 = vmatprep.subr.mxu0 0.0
    %353 = vmatpush2.msra.mxu0 0.0
    %354 = vmatprep.subr.mxu0 0.0
    %355 = vmatpush2.msra.mxu0 0.0
    %356 = vmatprep.subr.mxu0 0.0
    %357 = vmatpush2.msra.mxu0 0.0
    %358 = vmatprep.subr.mxu0 0.0
    %359 = vmatpush2.msra.mxu0 0.0
    %360 = vmatprep.subr.mxu0 0.0
    %361 = vmatpush2.msra.mxu0 0.0
    %362 = vmatprep.subr.mxu0 0.0
    %363 = vmatpush2.msra.mxu0 0.0
    %364 = vmatprep.subr.mxu0 0.0
    %365 = vmatpush2.msra.mxu0 0.0
    %366 = vmatprep.subr.mxu0 0.0
    %367 = vmatpush2.msra.mxu0 0.0
    %368 = vmatprep.mubr.f32.mxu0 0.0
    %369 = vmatmul.mubr.f32.gmra.mxu0 %v281
    %v370 = vpop.f32.mrf.mxu0
    %v371 = vadd.f32 %v303, %v370
    %v372 = vpop.f32.mrf.mxu0
    %373 = vmatprep.mubr.f32.mxu0 0.0
    %374 = vmatmul.mubr.f32.gmra.mxu0 %v282
    %v375 = vpop.f32.mrf.mxu0
    %v376 = vadd.f32 %v303, %v375
    %v377 = vpop.f32.mrf.mxu0
    %378 = vdwg.mxu0
    %v379 = vmul.f32 %v371, %v371
    %v380 = vmul.f32 %v376, %v376
    %381 = vadd.xlane.f32.xlu0 %v379
    %v382 = vpop.xlane.xlu0 %381
    %383 = vadd.xlane.f32.xlu0 %v380
    %v384 = vpop.xlane.xlu0 %383
    %v385 = vmax.f32 %v382, 1e-24
    %v386 = vmax.f32 %v384, 1e-24
    %v387 = vrsqrt.pop %v385
    %v388 = vrsqrt.pop %v386
    %v389 = vmul.f32 %v371, %v387
    %v390 = vmul.f32 %v376, %v388
    %v391 = vld [vmem:[%s5] sm:$0xff]
    %v392 = vld [vmem:[%s5 + $0x8] sm:$0xff]
    %v393 = vld [vmem:[%s5 + $0x10] sm:$0xff]
    %v394 = vld [vmem:[%s5 + $0x18] sm:$0xff]
    %v395 = vld [vmem:[%s5 + $0x20] sm:$0xff]
    %v396 = vld [vmem:[%s5 + $0x28] sm:$0xff]
    %v397 = vld [vmem:[%s5 + $0x30] sm:$0xff]
    %v398 = vld [vmem:[%s5 + $0x38] sm:$0xff]
    %v399 = vld [vmem:[%s5 + $0x40] sm:$0xff]
    %v400 = vld [vmem:[%s5 + $0x48] sm:$0xff]
    %v401 = vld [vmem:[%s5 + $0x50] sm:$0xff]
    %v402 = vld [vmem:[%s5 + $0x58] sm:$0xff]
    %v403 = vld [vmem:[%s5 + $0x60] sm:$0xff]
    %v404 = vld [vmem:[%s5 + $0x68] sm:$0xff]
    %v405 = vld [vmem:[%s5 + $0x70] sm:$0xff]
    %v406 = vld [vmem:[%s5 + $0x78] sm:$0xff]
    %v407 = vld [vmem:[%s5 + $0x80] sm:$0xff]
    %v408 = vld [vmem:[%s5 + $0x88] sm:$0xff]
    %v409 = vld [vmem:[%s5 + $0x90] sm:$0xff]
    %v410 = vld [vmem:[%s5 + $0x98] sm:$0xff]
    %v411 = vld [vmem:[%s5 + $0xa0] sm:$0xff]
    %v412 = vld [vmem:[%s5 + $0xa8] sm:$0xff]
    %v413 = vld [vmem:[%s5 + $0xb0] sm:$0xff]
    %v414 = vld [vmem:[%s5 + $0xb8] sm:$0xff]
    %v415 = vld [vmem:[%s5 + $0xc0] sm:$0xff]
    %v416 = vld [vmem:[%s5 + $0xc8] sm:$0xff]
    %v417 = vld [vmem:[%s5 + $0xd0] sm:$0xff]
    %v418 = vld [vmem:[%s5 + $0xd8] sm:$0xff]
    %v419 = vld [vmem:[%s5 + $0xe0] sm:$0xff]
    %v420 = vld [vmem:[%s5 + $0xe8] sm:$0xff]
    %v421 = vld [vmem:[%s5 + $0xf0] sm:$0xff]
    %v422 = vld [vmem:[%s5 + $0xf8] sm:$0xff]
    %v423 = vld [vmem:[%s5 + $0x100] sm:$0xff]
    %v424 = vld [vmem:[%s5 + $0x108] sm:$0xff]
    %v425 = vld [vmem:[%s5 + $0x110] sm:$0xff]
    %v426 = vld [vmem:[%s5 + $0x118] sm:$0xff]
    %v427 = vld [vmem:[%s5 + $0x120] sm:$0xff]
    %v428 = vld [vmem:[%s5 + $0x128] sm:$0xff]
    %v429 = vld [vmem:[%s5 + $0x130] sm:$0xff]
    %v430 = vld [vmem:[%s5 + $0x138] sm:$0xff]
    %v431 = vld [vmem:[%s5 + $0x140] sm:$0xff]
    %v432 = vld [vmem:[%s5 + $0x148] sm:$0xff]
    %v433 = vld [vmem:[%s5 + $0x150] sm:$0xff]
    %v434 = vld [vmem:[%s5 + $0x158] sm:$0xff]
    %v435 = vld [vmem:[%s5 + $0x160] sm:$0xff]
    %v436 = vld [vmem:[%s5 + $0x168] sm:$0xff]
    %v437 = vld [vmem:[%s5 + $0x170] sm:$0xff]
    %v438 = vld [vmem:[%s5 + $0x178] sm:$0xff]
    %v439 = vld [vmem:[%s5 + $0x180] sm:$0xff]
    %v440 = vld [vmem:[%s5 + $0x188] sm:$0xff]
    %v441 = vld [vmem:[%s5 + $0x190] sm:$0xff]
    %v442 = vld [vmem:[%s5 + $0x198] sm:$0xff]
    %v443 = vld [vmem:[%s5 + $0x1a0] sm:$0xff]
    %v444 = vld [vmem:[%s5 + $0x1a8] sm:$0xff]
    %v445 = vld [vmem:[%s5 + $0x1b0] sm:$0xff]
    %v446 = vld [vmem:[%s5 + $0x1b8] sm:$0xff]
    %v447 = vld [vmem:[%s5 + $0x1c0] sm:$0xff]
    %v448 = vld [vmem:[%s5 + $0x1c8] sm:$0xff]
    %v449 = vld [vmem:[%s5 + $0x1d0] sm:$0xff]
    %v450 = vld [vmem:[%s5 + $0x1d8] sm:$0xff]
    %v451 = vld [vmem:[%s5 + $0x1e0] sm:$0xff]
    %v452 = vld [vmem:[%s5 + $0x1e8] sm:$0xff]
    %v453 = vld [vmem:[%s5 + $0x1f0] sm:$0xff]
    %v454 = vld [vmem:[%s5 + $0x1f8] sm:$0xff]
    %v455 = vmul.f32 %v391, 0.999
    %v456 = vmul.f32 %v392, 0.999
    %v457 = vmul.f32 %v393, 0.999
    %v458 = vmul.f32 %v394, 0.999
    %v459 = vmul.f32 %v395, 0.999
    %v460 = vmul.f32 %v396, 0.999
    %v461 = vmul.f32 %v397, 0.999
    %v462 = vmul.f32 %v398, 0.999
    %v463 = vmul.f32 %v399, 0.999
    %v464 = vmul.f32 %v400, 0.999
    %v465 = vmul.f32 %v401, 0.999
    %v466 = vmul.f32 %v402, 0.999
    %v467 = vmul.f32 %v403, 0.999
    %v468 = vmul.f32 %v404, 0.999
    %v469 = vmul.f32 %v405, 0.999
    %v470 = vmul.f32 %v406, 0.999
    %v471 = vmul.f32 %v407, 0.999
    %v472 = vmul.f32 %v408, 0.999
    %v473 = vmul.f32 %v409, 0.999
    %v474 = vmul.f32 %v410, 0.999
    %v475 = vmul.f32 %v411, 0.999
    %v476 = vmul.f32 %v412, 0.999
    %v477 = vmul.f32 %v413, 0.999
    %v478 = vmul.f32 %v414, 0.999
    %v479 = vmul.f32 %v415, 0.999
    %v480 = vmul.f32 %v416, 0.999
    %v481 = vmul.f32 %v417, 0.999
    %v482 = vmul.f32 %v418, 0.999
    %v483 = vmul.f32 %v419, 0.999
    %v484 = vmul.f32 %v420, 0.999
    %v485 = vmul.f32 %v421, 0.999
    %v486 = vmul.f32 %v422, 0.999
    %v487 = vmul.f32 %v423, 0.999
    %v488 = vmul.f32 %v424, 0.999
    %v489 = vmul.f32 %v425, 0.999
    %v490 = vmul.f32 %v426, 0.999
    %v491 = vmul.f32 %v427, 0.999
    %v492 = vmul.f32 %v428, 0.999
    %v493 = vmul.f32 %v429, 0.999
    %v494 = vmul.f32 %v430, 0.999
    %v495 = vmul.f32 %v431, 0.999
    %v496 = vmul.f32 %v432, 0.999
    %v497 = vmul.f32 %v433, 0.999
    %v498 = vmul.f32 %v434, 0.999
    %v499 = vmul.f32 %v435, 0.999
    %v500 = vmul.f32 %v436, 0.999
    %v501 = vmul.f32 %v437, 0.999
    %v502 = vmul.f32 %v438, 0.999
    %v503 = vmul.f32 %v439, 0.999
    %v504 = vmul.f32 %v440, 0.999
    %v505 = vmul.f32 %v441, 0.999
    %v506 = vmul.f32 %v442, 0.999
    %v507 = vmul.f32 %v443, 0.999
    %v508 = vmul.f32 %v444, 0.999
    %v509 = vmul.f32 %v445, 0.999
    %v510 = vmul.f32 %v446, 0.999
    %v511 = vmul.f32 %v447, 0.999
    %v512 = vmul.f32 %v448, 0.999
    %v513 = vmul.f32 %v449, 0.999
    %v514 = vmul.f32 %v450, 0.999
    %v515 = vmul.f32 %v451, 0.999
    %v516 = vmul.f32 %v452, 0.999
    %v517 = vmul.f32 %v453, 0.999
    %v518 = vmul.f32 %v454, 0.999
    %v519 = vld [vmem:[%s3] sm:$0xff]
    %v520 = vld [vmem:[%s3 + $0x8] sm:$0xff]
    %v521 = vld [vmem:[%s3 + $0x10] sm:$0xff]
    %v522 = vld [vmem:[%s3 + $0x18] sm:$0xff]
    %v523 = vld [vmem:[%s3 + $0x20] sm:$0xff]
    %v524 = vld [vmem:[%s3 + $0x28] sm:$0xff]
    %v525 = vld [vmem:[%s3 + $0x30] sm:$0xff]
    %v526 = vld [vmem:[%s3 + $0x38] sm:$0xff]
    %v527 = vld [vmem:[%s3 + $0x40] sm:$0xff]
    %v528 = vld [vmem:[%s3 + $0x48] sm:$0xff]
    %v529 = vld [vmem:[%s3 + $0x50] sm:$0xff]
    %v530 = vld [vmem:[%s3 + $0x58] sm:$0xff]
    %v531 = vld [vmem:[%s3 + $0x60] sm:$0xff]
    %v532 = vld [vmem:[%s3 + $0x68] sm:$0xff]
    %v533 = vld [vmem:[%s3 + $0x70] sm:$0xff]
    %v534 = vld [vmem:[%s3 + $0x78] sm:$0xff]
    %v535 = vld [vmem:[%s3 + $0x80] sm:$0xff]
    %v536 = vld [vmem:[%s3 + $0x88] sm:$0xff]
    %v537 = vld [vmem:[%s3 + $0x90] sm:$0xff]
    %v538 = vld [vmem:[%s3 + $0x98] sm:$0xff]
    %v539 = vld [vmem:[%s3 + $0xa0] sm:$0xff]
    %v540 = vld [vmem:[%s3 + $0xa8] sm:$0xff]
    %v541 = vld [vmem:[%s3 + $0xb0] sm:$0xff]
    %v542 = vld [vmem:[%s3 + $0xb8] sm:$0xff]
    %v543 = vld [vmem:[%s3 + $0xc0] sm:$0xff]
    %v544 = vld [vmem:[%s3 + $0xc8] sm:$0xff]
    %v545 = vld [vmem:[%s3 + $0xd0] sm:$0xff]
    %v546 = vld [vmem:[%s3 + $0xd8] sm:$0xff]
    %v547 = vld [vmem:[%s3 + $0xe0] sm:$0xff]
    %v548 = vld [vmem:[%s3 + $0xe8] sm:$0xff]
    %v549 = vld [vmem:[%s3 + $0xf0] sm:$0xff]
    %v550 = vld [vmem:[%s3 + $0xf8] sm:$0xff]
    %v551 = vld [vmem:[%s3 + $0x100] sm:$0xff]
    %v552 = vld [vmem:[%s3 + $0x108] sm:$0xff]
    %v553 = vld [vmem:[%s3 + $0x110] sm:$0xff]
    %v554 = vld [vmem:[%s3 + $0x118] sm:$0xff]
    %v555 = vld [vmem:[%s3 + $0x120] sm:$0xff]
    %v556 = vld [vmem:[%s3 + $0x128] sm:$0xff]
    %v557 = vld [vmem:[%s3 + $0x130] sm:$0xff]
    %v558 = vld [vmem:[%s3 + $0x138] sm:$0xff]
    %v559 = vld [vmem:[%s3 + $0x140] sm:$0xff]
    %v560 = vld [vmem:[%s3 + $0x148] sm:$0xff]
    %v561 = vld [vmem:[%s3 + $0x150] sm:$0xff]
    %v562 = vld [vmem:[%s3 + $0x158] sm:$0xff]
    %v563 = vld [vmem:[%s3 + $0x160] sm:$0xff]
    %v564 = vld [vmem:[%s3 + $0x168] sm:$0xff]
    %v565 = vld [vmem:[%s3 + $0x170] sm:$0xff]
    %v566 = vld [vmem:[%s3 + $0x178] sm:$0xff]
    %v567 = vmul.f32 %v519, 0.001
    %v568 = vmul.f32 %v520, 0.001
    %v569 = vmul.f32 %v521, 0.001
    %v570 = vmul.f32 %v522, 0.001
    %v571 = vmul.f32 %v523, 0.001
    %v572 = vmul.f32 %v524, 0.001
    %v573 = vmul.f32 %v525, 0.001
    %v574 = vmul.f32 %v526, 0.001
    %v575 = vmul.f32 %v527, 0.001
    %v576 = vmul.f32 %v528, 0.001
    %v577 = vmul.f32 %v529, 0.001
    %v578 = vmul.f32 %v530, 0.001
    %v579 = vmul.f32 %v531, 0.001
    %v580 = vmul.f32 %v532, 0.001
    %v581 = vmul.f32 %v533, 0.001
    %v582 = vmul.f32 %v534, 0.001
    %v583 = vmul.f32 %v535, 0.001
    %v584 = vmul.f32 %v536, 0.001
    %v585 = vmul.f32 %v537, 0.001
    %v586 = vmul.f32 %v538, 0.001
    %v587 = vmul.f32 %v539, 0.001
    %v588 = vmul.f32 %v540, 0.001
    %v589 = vmul.f32 %v541, 0.001
    %v590 = vmul.f32 %v542, 0.001
    %v591 = vmul.f32 %v543, 0.001
    %v592 = vmul.f32 %v544, 0.001
    %v593 = vmul.f32 %v545, 0.001
    %v594 = vmul.f32 %v546, 0.001
    %v595 = vmul.f32 %v547, 0.001
    %v596 = vmul.f32 %v548, 0.001
    %v597 = vmul.f32 %v549, 0.001
    %v598 = vmul.f32 %v550, 0.001
    %v599 = vmul.f32 %v551, 0.001
    %v600 = vmul.f32 %v552, 0.001
    %v601 = vmul.f32 %v553, 0.001
    %v602 = vmul.f32 %v554, 0.001
    %v603 = vmul.f32 %v555, 0.001
    %v604 = vmul.f32 %v556, 0.001
    %v605 = vmul.f32 %v557, 0.001
    %v606 = vmul.f32 %v558, 0.001
    %v607 = vmul.f32 %v559, 0.001
    %v608 = vmul.f32 %v560, 0.001
    %v609 = vmul.f32 %v561, 0.001
    %v610 = vmul.f32 %v562, 0.001
    %v611 = vmul.f32 %v563, 0.001
    %v612 = vmul.f32 %v564, 0.001
    %v613 = vmul.f32 %v565, 0.001
    %v614 = vmul.f32 %v566, 0.001
    %v615 = vmul.f32 %v283, 0.001
    %v616 = vmul.f32 %v284, 0.001
    %v617 = vmul.f32 %v285, 0.001
    %v618 = vmul.f32 %v286, 0.001
    %v619 = vmul.f32 %v287, 0.001
    %v620 = vmul.f32 %v288, 0.001
    %v621 = vmul.f32 %v289, 0.001
    %v622 = vmul.f32 %v290, 0.001
    %v623 = vmul.f32 %v291, 0.001
    %v624 = vmul.f32 %v292, 0.001
    %v625 = vmul.f32 %v293, 0.001
    %v626 = vmul.f32 %v294, 0.001
    %v627 = vmul.f32 %v295, 0.001
    %v628 = vmul.f32 %v296, 0.001
    %v629 = vmul.f32 %v297, 0.001
    %v630 = vmul.f32 %v298, 0.001
    %v631 = vadd.f32 %v455, %v567
    %v632 = vadd.f32 %v456, %v568
    %v633 = vadd.f32 %v457, %v569
    %v634 = vadd.f32 %v458, %v570
    %v635 = vadd.f32 %v459, %v571
    %v636 = vadd.f32 %v460, %v572
    %v637 = vadd.f32 %v461, %v573
    %v638 = vadd.f32 %v462, %v574
    %v639 = vadd.f32 %v463, %v575
    %v640 = vadd.f32 %v464, %v576
    %v641 = vadd.f32 %v465, %v577
    %v642 = vadd.f32 %v466, %v578
    %v643 = vadd.f32 %v467, %v579
    %v644 = vadd.f32 %v468, %v580
    %v645 = vadd.f32 %v469, %v581
    %v646 = vadd.f32 %v470, %v582
    %v647 = vadd.f32 %v471, %v583
    %v648 = vadd.f32 %v472, %v584
    %v649 = vadd.f32 %v473, %v585
    %v650 = vadd.f32 %v474, %v586
    %v651 = vadd.f32 %v475, %v587
    %v652 = vadd.f32 %v476, %v588
    %v653 = vadd.f32 %v477, %v589
    %v654 = vadd.f32 %v478, %v590
    %v655 = vadd.f32 %v479, %v591
    %v656 = vadd.f32 %v480, %v592
    %v657 = vadd.f32 %v481, %v593
    %v658 = vadd.f32 %v482, %v594
    %v659 = vadd.f32 %v483, %v595
    %v660 = vadd.f32 %v484, %v596
    %v661 = vadd.f32 %v485, %v597
    %v662 = vadd.f32 %v486, %v598
    %v663 = vadd.f32 %v487, %v599
    %v664 = vadd.f32 %v488, %v600
    %v665 = vadd.f32 %v489, %v601
    %v666 = vadd.f32 %v490, %v602
    %v667 = vadd.f32 %v491, %v603
    %v668 = vadd.f32 %v492, %v604
    %v669 = vadd.f32 %v493, %v605
    %v670 = vadd.f32 %v494, %v606
    %v671 = vadd.f32 %v495, %v607
    %v672 = vadd.f32 %v496, %v608
    %v673 = vadd.f32 %v497, %v609
    %v674 = vadd.f32 %v498, %v610
    %v675 = vadd.f32 %v499, %v611
    %v676 = vadd.f32 %v500, %v612
    %v677 = vadd.f32 %v501, %v613
    %v678 = vadd.f32 %v502, %v614
    %v679 = vadd.f32 %v503, %v615
    %v680 = vadd.f32 %v504, %v616
    %v681 = vadd.f32 %v505, %v617
    %v682 = vadd.f32 %v506, %v618
    %v683 = vadd.f32 %v507, %v619
    %v684 = vadd.f32 %v508, %v620
    %v685 = vadd.f32 %v509, %v621
    %v686 = vadd.f32 %v510, %v622
    %v687 = vadd.f32 %v511, %v623
    %v688 = vadd.f32 %v512, %v624
    %v689 = vadd.f32 %v513, %v625
    %v690 = vadd.f32 %v514, %v626
    %v691 = vadd.f32 %v515, %v627
    %v692 = vadd.f32 %v516, %v628
    %v693 = vadd.f32 %v517, %v629
    %v694 = vadd.f32 %v518, %v630
    %695 = vst [vmem:[%s12] sm:$0xff] %v631
    %696 = vst [vmem:[%s12 + $0x8] sm:$0xff] %v632
    %697 = vst [vmem:[%s12 + $0x10] sm:$0xff] %v633
    %698 = vst [vmem:[%s12 + $0x18] sm:$0xff] %v634
    %699 = vst [vmem:[%s12 + $0x20] sm:$0xff] %v635
    %700 = vst [vmem:[%s12 + $0x28] sm:$0xff] %v636
    %701 = vst [vmem:[%s12 + $0x30] sm:$0xff] %v637
    %702 = vst [vmem:[%s12 + $0x38] sm:$0xff] %v638
    %703 = vst [vmem:[%s12 + $0x40] sm:$0xff] %v639
    %704 = vst [vmem:[%s12 + $0x48] sm:$0xff] %v640
    %705 = vst [vmem:[%s12 + $0x50] sm:$0xff] %v641
    %706 = vst [vmem:[%s12 + $0x58] sm:$0xff] %v642
    %707 = vst [vmem:[%s12 + $0x60] sm:$0xff] %v643
    %708 = vst [vmem:[%s12 + $0x68] sm:$0xff] %v644
    %709 = vst [vmem:[%s12 + $0x70] sm:$0xff] %v645
    %710 = vst [vmem:[%s12 + $0x78] sm:$0xff] %v646
    %711 = vst [vmem:[%s12 + $0x80] sm:$0xff] %v647
    %712 = vst [vmem:[%s12 + $0x88] sm:$0xff] %v648
    %713 = vst [vmem:[%s12 + $0x90] sm:$0xff] %v649
    %714 = vst [vmem:[%s12 + $0x98] sm:$0xff] %v650
    %715 = vst [vmem:[%s12 + $0xa0] sm:$0xff] %v651
    %716 = vst [vmem:[%s12 + $0xa8] sm:$0xff] %v652
    %717 = vst [vmem:[%s12 + $0xb0] sm:$0xff] %v653
    %718 = vst [vmem:[%s12 + $0xb8] sm:$0xff] %v654
    %719 = vst [vmem:[%s12 + $0xc0] sm:$0xff] %v655
    %720 = vst [vmem:[%s12 + $0xc8] sm:$0xff] %v656
    %721 = vst [vmem:[%s12 + $0xd0] sm:$0xff] %v657
    %722 = vst [vmem:[%s12 + $0xd8] sm:$0xff] %v658
    %723 = vst [vmem:[%s12 + $0xe0] sm:$0xff] %v659
    %724 = vst [vmem:[%s12 + $0xe8] sm:$0xff] %v660
    %725 = vst [vmem:[%s12 + $0xf0] sm:$0xff] %v661
    %726 = vst [vmem:[%s12 + $0xf8] sm:$0xff] %v662
    %727 = vst [vmem:[%s12 + $0x100] sm:$0xff] %v663
    %728 = vst [vmem:[%s12 + $0x108] sm:$0xff] %v664
    %729 = vst [vmem:[%s12 + $0x110] sm:$0xff] %v665
    %730 = vst [vmem:[%s12 + $0x118] sm:$0xff] %v666
    %731 = vst [vmem:[%s12 + $0x120] sm:$0xff] %v667
    %732 = vst [vmem:[%s12 + $0x128] sm:$0xff] %v668
    %733 = vst [vmem:[%s12 + $0x130] sm:$0xff] %v669
    %734 = vst [vmem:[%s12 + $0x138] sm:$0xff] %v670
    %735 = vst [vmem:[%s12 + $0x140] sm:$0xff] %v671
    %736 = vst [vmem:[%s12 + $0x148] sm:$0xff] %v672
    %737 = vst [vmem:[%s12 + $0x150] sm:$0xff] %v673
    %738 = vst [vmem:[%s12 + $0x158] sm:$0xff] %v674
    %739 = vst [vmem:[%s12 + $0x160] sm:$0xff] %v675
    %740 = vst [vmem:[%s12 + $0x168] sm:$0xff] %v676
    %741 = vst [vmem:[%s12 + $0x170] sm:$0xff] %v677
    %742 = vst [vmem:[%s12 + $0x178] sm:$0xff] %v678
    %743 = vst [vmem:[%s12 + $0x180] sm:$0xff] %v679
    %744 = vst [vmem:[%s12 + $0x188] sm:$0xff] %v680
    %745 = vst [vmem:[%s12 + $0x190] sm:$0xff] %v681
    %746 = vst [vmem:[%s12 + $0x198] sm:$0xff] %v682
    %747 = vst [vmem:[%s12 + $0x1a0] sm:$0xff] %v683
    %748 = vst [vmem:[%s12 + $0x1a8] sm:$0xff] %v684
    %749 = vst [vmem:[%s12 + $0x1b0] sm:$0xff] %v685
    %750 = vst [vmem:[%s12 + $0x1b8] sm:$0xff] %v686
    %751 = vst [vmem:[%s12 + $0x1c0] sm:$0xff] %v687
    %752 = vst [vmem:[%s12 + $0x1c8] sm:$0xff] %v688
    %753 = vst [vmem:[%s12 + $0x1d0] sm:$0xff] %v689
    %754 = vst [vmem:[%s12 + $0x1d8] sm:$0xff] %v690
    %755 = vst [vmem:[%s12 + $0x1e0] sm:$0xff] %v691
    %756 = vst [vmem:[%s12 + $0x1e8] sm:$0xff] %v692
    %757 = vst [vmem:[%s12 + $0x1f0] sm:$0xff] %v693
    %758 = vst [vmem:[%s12 + $0x1f8] sm:$0xff] %v694
    %v759 = vld [vmem:[%s6] sm:$0x7]
    %v760 = vmul.f32 %v759, 0.999
    %v761 = vld [vmem:[%s4] sm:$0x7]
    %v762 = vmul.f32 %v761, 0.001
    %v763 = vadd.f32 %v760, %v762
    %764 = vst [vmem:[%s13] sm:$0x7] %v763
    %v765 = vld [vmem:[%s0 + $0x20] sm:$0xff]
    %v766 = vld [vmem:[%s0 + $0x28] sm:$0xff]
    %v767 = vld [vmem:[%s12] sm:$0xff]
    %v768 = vld [vmem:[%s12 + $0x8] sm:$0xff]
    %v769 = vld [vmem:[%s12 + $0x10] sm:$0xff]
    %v770 = vld [vmem:[%s12 + $0x18] sm:$0xff]
    %v771 = vld [vmem:[%s12 + $0x20] sm:$0xff]
    %v772 = vld [vmem:[%s12 + $0x28] sm:$0xff]
    %v773 = vld [vmem:[%s12 + $0x30] sm:$0xff]
    %v774 = vld [vmem:[%s12 + $0x38] sm:$0xff]
    %v775 = vld [vmem:[%s12 + $0x40] sm:$0xff]
    %v776 = vld [vmem:[%s12 + $0x48] sm:$0xff]
    %v777 = vld [vmem:[%s12 + $0x50] sm:$0xff]
    %v778 = vld [vmem:[%s12 + $0x58] sm:$0xff]
    %v779 = vld [vmem:[%s12 + $0x60] sm:$0xff]
    %v780 = vld [vmem:[%s12 + $0x68] sm:$0xff]
    %v781 = vld [vmem:[%s12 + $0x70] sm:$0xff]
    %v782 = vld [vmem:[%s12 + $0x78] sm:$0xff]
    %v783 = vld [vmem:[%s12 + $0x80] sm:$0xff]
    %v784 = vld [vmem:[%s12 + $0x88] sm:$0xff]
    %v785 = vld [vmem:[%s12 + $0x90] sm:$0xff]
    %v786 = vld [vmem:[%s12 + $0x98] sm:$0xff]
    %v787 = vld [vmem:[%s12 + $0xa0] sm:$0xff]
    %v788 = vld [vmem:[%s12 + $0xa8] sm:$0xff]
    %v789 = vld [vmem:[%s12 + $0xb0] sm:$0xff]
    %v790 = vld [vmem:[%s12 + $0xb8] sm:$0xff]
    %v791 = vld [vmem:[%s12 + $0xc0] sm:$0xff]
    %v792 = vld [vmem:[%s12 + $0xc8] sm:$0xff]
    %v793 = vld [vmem:[%s12 + $0xd0] sm:$0xff]
    %v794 = vld [vmem:[%s12 + $0xd8] sm:$0xff]
    %v795 = vld [vmem:[%s12 + $0xe0] sm:$0xff]
    %v796 = vld [vmem:[%s12 + $0xe8] sm:$0xff]
    %v797 = vld [vmem:[%s12 + $0xf0] sm:$0xff]
    %v798 = vld [vmem:[%s12 + $0xf8] sm:$0xff]
    %v799 = vld [vmem:[%s13] sm:$0x1]
    %v800 = vlaneseq
    %v801 = vshrl.u32 %v800, 7
    %v802 = vsub.s32 0, %v801
    %v803 = vrot.slane %v799, %v802
    %804 = vmatprep.subr.mxu0 0.0
    %805 = vmatpush1.msra.mxu0 %v782
    %806 = vmatprep.subr.mxu0 0.0
    %807 = vmatpush1.msra.mxu0 %v781
    %808 = vmatprep.subr.mxu0 0.0
    %809 = vmatpush1.msra.mxu0 %v780
    %810 = vmatprep.subr.mxu0 0.0
    %811 = vmatpush1.msra.mxu0 %v779
    %812 = vmatprep.subr.mxu0 0.0
    %813 = vmatpush1.msra.mxu0 %v778
    %814 = vmatprep.subr.mxu0 0.0
    %815 = vmatpush1.msra.mxu0 %v777
    %816 = vmatprep.subr.mxu0 0.0
    %817 = vmatpush1.msra.mxu0 %v776
    %818 = vmatprep.subr.mxu0 0.0
    %819 = vmatpush1.msra.mxu0 %v775
    %820 = vmatprep.subr.mxu0 0.0
    %821 = vmatpush1.msra.mxu0 %v774
    %822 = vmatprep.subr.mxu0 0.0
    %823 = vmatpush1.msra.mxu0 %v773
    %824 = vmatprep.subr.mxu0 0.0
    %825 = vmatpush1.msra.mxu0 %v772
    %826 = vmatprep.subr.mxu0 0.0
    %827 = vmatpush1.msra.mxu0 %v771
    %828 = vmatprep.subr.mxu0 0.0
    %829 = vmatpush1.msra.mxu0 %v770
    %830 = vmatprep.subr.mxu0 0.0
    %831 = vmatpush1.msra.mxu0 %v769
    %832 = vmatprep.subr.mxu0 0.0
    %833 = vmatpush1.msra.mxu0 %v768
    %834 = vmatprep.subr.mxu0 0.0
    %835 = vmatpush1.msra.mxu0 %v767
    %836 = vmatprep.subr.mxu0 0.0
    %837 = vmatpush2.msra.mxu0 %v798
    %838 = vmatprep.subr.mxu0 0.0
    %839 = vmatpush2.msra.mxu0 %v797
    %840 = vmatprep.subr.mxu0 0.0
    %841 = vmatpush2.msra.mxu0 %v796
    %842 = vmatprep.subr.mxu0 0.0
    %843 = vmatpush2.msra.mxu0 %v795
    %844 = vmatprep.subr.mxu0 0.0
    %845 = vmatpush2.msra.mxu0 %v794
    %846 = vmatprep.subr.mxu0 0.0
    %847 = vmatpush2.msra.mxu0 %v793
    %848 = vmatprep.subr.mxu0 0.0
    %849 = vmatpush2.msra.mxu0 %v792
    %850 = vmatprep.subr.mxu0 0.0
    %851 = vmatpush2.msra.mxu0 %v791
    %852 = vmatprep.subr.mxu0 0.0
    %853 = vmatpush2.msra.mxu0 %v790
    %854 = vmatprep.subr.mxu0 0.0
    %855 = vmatpush2.msra.mxu0 %v789
    %856 = vmatprep.subr.mxu0 0.0
    %857 = vmatpush2.msra.mxu0 %v788
    %858 = vmatprep.subr.mxu0 0.0
    %859 = vmatpush2.msra.mxu0 %v787
    %860 = vmatprep.subr.mxu0 0.0
    %861 = vmatpush2.msra.mxu0 %v786
    %862 = vmatprep.subr.mxu0 0.0
    %863 = vmatpush2.msra.mxu0 %v785
    %864 = vmatprep.subr.mxu0 0.0
    %865 = vmatpush2.msra.mxu0 %v784
    %866 = vmatprep.subr.mxu0 0.0
    %867 = vmatpush2.msra.mxu0 %v783
    %868 = vmatprep.mubr.f32.mxu0 %v766
    %869 = vmatmul.mubr.f32.gmra.mxu0 %v765
    %v870 = vpop.f32.mrf.mxu0
    %v871 = vadd.f32 %v803, %v870
    %v872 = vpop.f32.mrf.mxu0
    %873 = vdwg.mxu0
    %v874 = vmax.f32 %v871, 0.0
    %v875 = vld [vmem:[%s12 + $0x100] sm:$0xff]
    %v876 = vld [vmem:[%s12 + $0x108] sm:$0xff]
    %v877 = vld [vmem:[%s12 + $0x110] sm:$0xff]
    %v878 = vld [vmem:[%s12 + $0x118] sm:$0xff]
    %v879 = vld [vmem:[%s12 + $0x120] sm:$0xff]
    %v880 = vld [vmem:[%s12 + $0x128] sm:$0xff]
    %v881 = vld [vmem:[%s12 + $0x130] sm:$0xff]
    %v882 = vld [vmem:[%s12 + $0x138] sm:$0xff]
    %v883 = vld [vmem:[%s12 + $0x140] sm:$0xff]
    %v884 = vld [vmem:[%s12 + $0x148] sm:$0xff]
    %v885 = vld [vmem:[%s12 + $0x150] sm:$0xff]
    %v886 = vld [vmem:[%s12 + $0x158] sm:$0xff]
    %v887 = vld [vmem:[%s12 + $0x160] sm:$0xff]
    %v888 = vld [vmem:[%s12 + $0x168] sm:$0xff]
    %v889 = vld [vmem:[%s12 + $0x170] sm:$0xff]
    %v890 = vld [vmem:[%s12 + $0x178] sm:$0xff]
    %v891 = vld [vmem:[%s13 + $0x1] sm:$0x1]
    %v892 = vlaneseq
    %v893 = vshrl.u32 %v892, 7
    %v894 = vsub.s32 0, %v893
    %v895 = vrot.slane %v891, %v894
    %896 = vmatprep.subr.mxu0 0.0
    %897 = vmatpush1.msra.mxu0 %v890
    %898 = vmatprep.subr.mxu0 0.0
    %899 = vmatpush1.msra.mxu0 %v889
    %900 = vmatprep.subr.mxu0 0.0
    %901 = vmatpush1.msra.mxu0 %v888
    %902 = vmatprep.subr.mxu0 0.0
    %903 = vmatpush1.msra.mxu0 %v887
    %904 = vmatprep.subr.mxu0 0.0
    %905 = vmatpush1.msra.mxu0 %v886
    %906 = vmatprep.subr.mxu0 0.0
    %907 = vmatpush1.msra.mxu0 %v885
    %908 = vmatprep.subr.mxu0 0.0
    %909 = vmatpush1.msra.mxu0 %v884
    %910 = vmatprep.subr.mxu0 0.0
    %911 = vmatpush1.msra.mxu0 %v883
    %912 = vmatprep.subr.mxu0 0.0
    %913 = vmatpush1.msra.mxu0 %v882
    %914 = vmatprep.subr.mxu0 0.0
    %915 = vmatpush1.msra.mxu0 %v881
    %916 = vmatprep.subr.mxu0 0.0
    %917 = vmatpush1.msra.mxu0 %v880
    %918 = vmatprep.subr.mxu0 0.0
    %919 = vmatpush1.msra.mxu0 %v879
    %920 = vmatprep.subr.mxu0 0.0
    %921 = vmatpush1.msra.mxu0 %v878
    %922 = vmatprep.subr.mxu0 0.0
    %923 = vmatpush1.msra.mxu0 %v877
    %924 = vmatprep.subr.mxu0 0.0
    %925 = vmatpush1.msra.mxu0 %v876
    %926 = vmatprep.subr.mxu0 0.0
    %927 = vmatpush1.msra.mxu0 %v875
    %928 = vmatprep.subr.mxu0 0.0
    %929 = vmatpush2.msra.mxu0 0.0
    %930 = vmatprep.subr.mxu0 0.0
    %931 = vmatpush2.msra.mxu0 0.0
    %932 = vmatprep.subr.mxu0 0.0
    %933 = vmatpush2.msra.mxu0 0.0
    %934 = vmatprep.subr.mxu0 0.0
    %935 = vmatpush2.msra.mxu0 0.0
    %936 = vmatprep.subr.mxu0 0.0
    %937 = vmatpush2.msra.mxu0 0.0
    %938 = vmatprep.subr.mxu0 0.0
    %939 = vmatpush2.msra.mxu0 0.0
    %940 = vmatprep.subr.mxu0 0.0
    %941 = vmatpush2.msra.mxu0 0.0
    %942 = vmatprep.subr.mxu0 0.0
    %943 = vmatpush2.msra.mxu0 0.0
    %944 = vmatprep.subr.mxu0 0.0
    %945 = vmatpush2.msra.mxu0 0.0
    %946 = vmatprep.subr.mxu0 0.0
    %947 = vmatpush2.msra.mxu0 0.0
    %948 = vmatprep.subr.mxu0 0.0
    %949 = vmatpush2.msra.mxu0 0.0
    %950 = vmatprep.subr.mxu0 0.0
    %951 = vmatpush2.msra.mxu0 0.0
    %952 = vmatprep.subr.mxu0 0.0
    %953 = vmatpush2.msra.mxu0 0.0
    %954 = vmatprep.subr.mxu0 0.0
    %955 = vmatpush2.msra.mxu0 0.0
    %956 = vmatprep.subr.mxu0 0.0
    %957 = vmatpush2.msra.mxu0 0.0
    %958 = vmatprep.subr.mxu0 0.0
    %959 = vmatpush2.msra.mxu0 0.0
    %960 = vmatprep.mubr.f32.mxu0 0.0
    %961 = vmatmul.mubr.f32.gmra.mxu0 %v874
    %v962 = vpop.f32.mrf.mxu0
    %v963 = vadd.f32 %v895, %v962
    %v964 = vpop.f32.mrf.mxu0
    %965 = vdwg.mxu0
    %v966 = vmax.f32 %v963, 0.0
    %v967 = vld [vmem:[%s12 + $0x180] sm:$0xff]
    %v968 = vld [vmem:[%s12 + $0x188] sm:$0xff]
    %v969 = vld [vmem:[%s12 + $0x190] sm:$0xff]
    %v970 = vld [vmem:[%s12 + $0x198] sm:$0xff]
    %v971 = vld [vmem:[%s12 + $0x1a0] sm:$0xff]
    %v972 = vld [vmem:[%s12 + $0x1a8] sm:$0xff]
    %v973 = vld [vmem:[%s12 + $0x1b0] sm:$0xff]
    %v974 = vld [vmem:[%s12 + $0x1b8] sm:$0xff]
    %v975 = vld [vmem:[%s12 + $0x1c0] sm:$0xff]
    %v976 = vld [vmem:[%s12 + $0x1c8] sm:$0xff]
    %v977 = vld [vmem:[%s12 + $0x1d0] sm:$0xff]
    %v978 = vld [vmem:[%s12 + $0x1d8] sm:$0xff]
    %v979 = vld [vmem:[%s12 + $0x1e0] sm:$0xff]
    %v980 = vld [vmem:[%s12 + $0x1e8] sm:$0xff]
    %v981 = vld [vmem:[%s12 + $0x1f0] sm:$0xff]
    %v982 = vld [vmem:[%s12 + $0x1f8] sm:$0xff]
    %v983 = vld [vmem:[%s13 + $0x2] sm:$0x1]
    %v984 = vlaneseq
    %v985 = vshrl.u32 %v984, 7
    %v986 = vsub.s32 0, %v985
    %v987 = vrot.slane %v983, %v986
    %988 = vmatprep.subr.mxu0 0.0
    %989 = vmatpush1.msra.mxu0 %v982
    %990 = vmatprep.subr.mxu0 0.0
    %991 = vmatpush1.msra.mxu0 %v981
    %992 = vmatprep.subr.mxu0 0.0
    %993 = vmatpush1.msra.mxu0 %v980
    %994 = vmatprep.subr.mxu0 0.0
    %995 = vmatpush1.msra.mxu0 %v979
    %996 = vmatprep.subr.mxu0 0.0
    %997 = vmatpush1.msra.mxu0 %v978
    %998 = vmatprep.subr.mxu0 0.0
    %999 = vmatpush1.msra.mxu0 %v977
    %1000 = vmatprep.subr.mxu0 0.0
    %1001 = vmatpush1.msra.mxu0 %v976
    %1002 = vmatprep.subr.mxu0 0.0
    %1003 = vmatpush1.msra.mxu0 %v975
    %1004 = vmatprep.subr.mxu0 0.0
    %1005 = vmatpush1.msra.mxu0 %v974
    %1006 = vmatprep.subr.mxu0 0.0
    %1007 = vmatpush1.msra.mxu0 %v973
    %1008 = vmatprep.subr.mxu0 0.0
    %1009 = vmatpush1.msra.mxu0 %v972
    %1010 = vmatprep.subr.mxu0 0.0
    %1011 = vmatpush1.msra.mxu0 %v971
    %1012 = vmatprep.subr.mxu0 0.0
    %1013 = vmatpush1.msra.mxu0 %v970
    %1014 = vmatprep.subr.mxu0 0.0
    %1015 = vmatpush1.msra.mxu0 %v969
    %1016 = vmatprep.subr.mxu0 0.0
    %1017 = vmatpush1.msra.mxu0 %v968
    %1018 = vmatprep.subr.mxu0 0.0
    %1019 = vmatpush1.msra.mxu0 %v967
    %1020 = vmatprep.subr.mxu0 0.0
    %1021 = vmatpush2.msra.mxu0 0.0
    %1022 = vmatprep.subr.mxu0 0.0
    %1023 = vmatpush2.msra.mxu0 0.0
    %1024 = vmatprep.subr.mxu0 0.0
    %1025 = vmatpush2.msra.mxu0 0.0
    %1026 = vmatprep.subr.mxu0 0.0
    %1027 = vmatpush2.msra.mxu0 0.0
    %1028 = vmatprep.subr.mxu0 0.0
    %1029 = vmatpush2.msra.mxu0 0.0
    %1030 = vmatprep.subr.mxu0 0.0
    %1031 = vmatpush2.msra.mxu0 0.0
    %1032 = vmatprep.subr.mxu0 0.0
    %1033 = vmatpush2.msra.mxu0 0.0
    %1034 = vmatprep.subr.mxu0 0.0
    %1035 = vmatpush2.msra.mxu0 0.0
    %1036 = vmatprep.subr.mxu0 0.0
    %1037 = vmatpush2.msra.mxu0 0.0
    %1038 = vmatprep.subr.mxu0 0.0
    %1039 = vmatpush2.msra.mxu0 0.0
    %1040 = vmatprep.subr.mxu0 0.0
    %1041 = vmatpush2.msra.mxu0 0.0
    %1042 = vmatprep.subr.mxu0 0.0
    %1043 = vmatpush2.msra.mxu0 0.0
    %1044 = vmatprep.subr.mxu0 0.0
    %1045 = vmatpush2.msra.mxu0 0.0
    %1046 = vmatprep.subr.mxu0 0.0
    %1047 = vmatpush2.msra.mxu0 0.0
    %1048 = vmatprep.subr.mxu0 0.0
    %1049 = vmatpush2.msra.mxu0 0.0
    %1050 = vmatprep.subr.mxu0 0.0
    %1051 = vmatpush2.msra.mxu0 0.0
    %1052 = vmatprep.mubr.f32.mxu0 0.0
    %1053 = vmatmul.mubr.f32.gmra.mxu0 %v966
    %v1054 = vpop.f32.mrf.mxu0
    %v1055 = vadd.f32 %v987, %v1054
    %v1056 = vpop.f32.mrf.mxu0
    %1057 = vdwg.mxu0
    %v1058 = vmul.f32 %v1055, %v1055
    %1059 = vadd.xlane.f32.xlu0 %v1058
    %v1060 = vpop.xlane.xlu0 %1059
    %v1061 = vmax.f32 %v1060, 1e-24
    %v1062 = vrsqrt.pop %v1061
    %v1063 = vmul.f32 %v1055, %v1062
    %v1064 = vlaneseq
    %v1065 = vand.u32 %v1064, 127
    %v1066 = vmul.f32 %v390, %v1063
    %1067 = vadd.xlane.f32.xlu0 %v1066
    %v1068 = vpop.xlane.xlu0 %1067
    %v1069 = vld [vmem:[%s7] sm:$0xff]
    %v1070 = vld [vmem:[%s7 + $0x8] sm:$0xff]
    %v1071 = vld [vmem:[%s7 + $0x10] sm:$0xff]
    %v1072 = vld [vmem:[%s7 + $0x18] sm:$0xff]
    %v1073 = vld [vmem:[%s7 + $0x20] sm:$0xff]
    %v1074 = vld [vmem:[%s7 + $0x28] sm:$0xff]
    %v1075 = vld [vmem:[%s7 + $0x30] sm:$0xff]
    %v1076 = vld [vmem:[%s7 + $0x38] sm:$0xff]
    %v1077 = vld [vmem:[%s7 + $0x40] sm:$0xff]
    %v1078 = vld [vmem:[%s7 + $0x48] sm:$0xff]
    %v1079 = vld [vmem:[%s7 + $0x50] sm:$0xff]
    %v1080 = vld [vmem:[%s7 + $0x58] sm:$0xff]
    %v1081 = vld [vmem:[%s7 + $0x60] sm:$0xff]
    %v1082 = vld [vmem:[%s7 + $0x68] sm:$0xff]
    %v1083 = vld [vmem:[%s7 + $0x70] sm:$0xff]
    %v1084 = vld [vmem:[%s7 + $0x78] sm:$0xff]
    %1085 = vmatprep.subr.mxu0 0.0
    %1086 = vmatpush1.xpose.msra.mxu0 %v1084
    %1087 = vmatprep.subr.mxu0 0.0
    %1088 = vmatpush1.xpose.msra.mxu0 %v1083
    %1089 = vmatprep.subr.mxu0 0.0
    %1090 = vmatpush1.xpose.msra.mxu0 %v1082
    %1091 = vmatprep.subr.mxu0 0.0
    %1092 = vmatpush1.xpose.msra.mxu0 %v1081
    %1093 = vmatprep.subr.mxu0 0.0
    %1094 = vmatpush1.xpose.msra.mxu0 %v1080
    %1095 = vmatprep.subr.mxu0 0.0
    %1096 = vmatpush1.xpose.msra.mxu0 %v1079
    %1097 = vmatprep.subr.mxu0 0.0
    %1098 = vmatpush1.xpose.msra.mxu0 %v1078
    %1099 = vmatprep.subr.mxu0 0.0
    %1100 = vmatpush1.xpose.msra.mxu0 %v1077
    %1101 = vmatprep.subr.mxu0 0.0
    %1102 = vmatpush1.xpose.msra.mxu0 %v1076
    %1103 = vmatprep.subr.mxu0 0.0
    %1104 = vmatpush1.xpose.msra.mxu0 %v1075
    %1105 = vmatprep.subr.mxu0 0.0
    %1106 = vmatpush1.xpose.msra.mxu0 %v1074
    %1107 = vmatprep.subr.mxu0 0.0
    %1108 = vmatpush1.xpose.msra.mxu0 %v1073
    %1109 = vmatprep.subr.mxu0 0.0
    %1110 = vmatpush1.xpose.msra.mxu0 %v1072
    %1111 = vmatprep.subr.mxu0 0.0
    %1112 = vmatpush1.xpose.msra.mxu0 %v1071
    %1113 = vmatprep.subr.mxu0 0.0
    %1114 = vmatpush1.xpose.msra.mxu0 %v1070
    %1115 = vmatprep.subr.mxu0 0.0
    %1116 = vmatpush1.xpose.msra.mxu0 %v1069
    %1117 = vmatprep.subr.mxu0 0.0
    %1118 = vmatpush2.xpose.msra.mxu0 0.0
    %1119 = vmatprep.subr.mxu0 0.0
    %1120 = vmatpush2.xpose.msra.mxu0 0.0
    %1121 = vmatprep.subr.mxu0 0.0
    %1122 = vmatpush2.xpose.msra.mxu0 0.0
    %1123 = vmatprep.subr.mxu0 0.0
    %1124 = vmatpush2.xpose.msra.mxu0 0.0
    %1125 = vmatprep.subr.mxu0 0.0
    %1126 = vmatpush2.xpose.msra.mxu0 0.0
    %1127 = vmatprep.subr.mxu0 0.0
    %1128 = vmatpush2.xpose.msra.mxu0 0.0
    %1129 = vmatprep.subr.mxu0 0.0
    %1130 = vmatpush2.xpose.msra.mxu0 0.0
    %1131 = vmatprep.subr.mxu0 0.0
    %1132 = vmatpush2.xpose.msra.mxu0 0.0
    %1133 = vmatprep.subr.mxu0 0.0
    %1134 = vmatpush2.xpose.msra.mxu0 0.0
    %1135 = vmatprep.subr.mxu0 0.0
    %1136 = vmatpush2.xpose.msra.mxu0 0.0
    %1137 = vmatprep.subr.mxu0 0.0
    %1138 = vmatpush2.xpose.msra.mxu0 0.0
    %1139 = vmatprep.subr.mxu0 0.0
    %1140 = vmatpush2.xpose.msra.mxu0 0.0
    %1141 = vmatprep.subr.mxu0 0.0
    %1142 = vmatpush2.xpose.msra.mxu0 0.0
    %1143 = vmatprep.subr.mxu0 0.0
    %1144 = vmatpush2.xpose.msra.mxu0 0.0
    %1145 = vmatprep.subr.mxu0 0.0
    %1146 = vmatpush2.xpose.msra.mxu0 0.0
    %1147 = vmatprep.subr.mxu0 0.0
    %1148 = vmatpush2.xpose.msra.mxu0 0.0
    %1149 = vmatprep.mubr.f32.mxu0 0.0
    %1150 = vmatmul.mubr.f32.gmra.mxu0 %v390
    %v1151 = vpop.f32.mrf.mxu0
    %v1152 = vadd.f32 0.0, %v1151
    %v1153 = vpop.f32.mrf.mxu0
    %1154 = vdwg.mxu0
    %vm1155 = vcmp.eq.s32.totalorder %v1065, 0
    %v1156 = vsel %vm1155, %v1068, %v1152
    %v1157 = vmul.f32 %v1156, 14.285714
    %1158 = vst [vmem:[#allocation8] sm:$0xff] %v1157
    %v1159 = vld [vmem:[%s8] sm:$0xff]
    %v1160 = vmul.f32 %v389, %v1159
    %1161 = vadd.xlane.f32.xlu0 %v1160
    %v1162 = vpop.xlane.xlu0 %1161
    %v1163 = vld [vmem:[%s9] sm:$0xff]
    %v1164 = vld [vmem:[%s9 + $0x8] sm:$0xff]
    %v1165 = vld [vmem:[%s9 + $0x10] sm:$0xff]
    %v1166 = vld [vmem:[%s9 + $0x18] sm:$0xff]
    %v1167 = vld [vmem:[%s9 + $0x20] sm:$0xff]
    %v1168 = vld [vmem:[%s9 + $0x28] sm:$0xff]
    %v1169 = vld [vmem:[%s9 + $0x30] sm:$0xff]
    %v1170 = vld [vmem:[%s9 + $0x38] sm:$0xff]
    %v1171 = vld [vmem:[%s9 + $0x40] sm:$0xff]
    %v1172 = vld [vmem:[%s9 + $0x48] sm:$0xff]
    %v1173 = vld [vmem:[%s9 + $0x50] sm:$0xff]
    %v1174 = vld [vmem:[%s9 + $0x58] sm:$0xff]
    %v1175 = vld [vmem:[%s9 + $0x60] sm:$0xff]
    %v1176 = vld [vmem:[%s9 + $0x68] sm:$0xff]
    %v1177 = vld [vmem:[%s9 + $0x70] sm:$0xff]
    %v1178 = vld [vmem:[%s9 + $0x78] sm:$0xff]
    %1179 = vmatprep.subr.mxu0 0.0
    %1180 = vmatpush1.xpose.msra.mxu0 %v1178
    %1181 = vmatprep.subr.mxu0 0.0
    %1182 = vmatpush1.xpose.msra.mxu0 %v1177
    %1183 = vmatprep.subr.mxu0 0.0
    %1184 = vmatpush1.xpose.msra.mxu0 %v1176
    %1185 = vmatprep.subr.mxu0 0.0
    %1186 = vmatpush1.xpose.msra.mxu0 %v1175
    %1187 = vmatprep.subr.mxu0 0.0
    %1188 = vmatpush1.xpose.msra.mxu0 %v1174
    %1189 = vmatprep.subr.mxu0 0.0
    %1190 = vmatpush1.xpose.msra.mxu0 %v1173
    %1191 = vmatprep.subr.mxu0 0.0
    %1192 = vmatpush1.xpose.msra.mxu0 %v1172
    %1193 = vmatprep.subr.mxu0 0.0
    %1194 = vmatpush1.xpose.msra.mxu0 %v1171
    %1195 = vmatprep.subr.mxu0 0.0
    %1196 = vmatpush1.xpose.msra.mxu0 %v1170
    %1197 = vmatprep.subr.mxu0 0.0
    %1198 = vmatpush1.xpose.msra.mxu0 %v1169
    %1199 = vmatprep.subr.mxu0 0.0
    %1200 = vmatpush1.xpose.msra.mxu0 %v1168
    %1201 = vmatprep.subr.mxu0 0.0
    %1202 = vmatpush1.xpose.msra.mxu0 %v1167
    %1203 = vmatprep.subr.mxu0 0.0
    %1204 = vmatpush1.xpose.msra.mxu0 %v1166
    %1205 = vmatprep.subr.mxu0 0.0
    %1206 = vmatpush1.xpose.msra.mxu0 %v1165
    %1207 = vmatprep.subr.mxu0 0.0
    %1208 = vmatpush1.xpose.msra.mxu0 %v1164
    %1209 = vmatprep.subr.mxu0 0.0
    %1210 = vmatpush1.xpose.msra.mxu0 %v1163
    %1211 = vmatprep.subr.mxu0 0.0
    %1212 = vmatpush2.xpose.msra.mxu0 0.0
    %1213 = vmatprep.subr.mxu0 0.0
    %1214 = vmatpush2.xpose.msra.mxu0 0.0
    %1215 = vmatprep.subr.mxu0 0.0
    %1216 = vmatpush2.xpose.msra.mxu0 0.0
    %1217 = vmatprep.subr.mxu0 0.0
    %1218 = vmatpush2.xpose.msra.mxu0 0.0
    %1219 = vmatprep.subr.mxu0 0.0
    %1220 = vmatpush2.xpose.msra.mxu0 0.0
    %1221 = vmatprep.subr.mxu0 0.0
    %1222 = vmatpush2.xpose.msra.mxu0 0.0
    %1223 = vmatprep.subr.mxu0 0.0
    %1224 = vmatpush2.xpose.msra.mxu0 0.0
    %1225 = vmatprep.subr.mxu0 0.0
    %1226 = vmatpush2.xpose.msra.mxu0 0.0
    %1227 = vmatprep.subr.mxu0 0.0
    %1228 = vmatpush2.xpose.msra.mxu0 0.0
    %1229 = vmatprep.subr.mxu0 0.0
    %1230 = vmatpush2.xpose.msra.mxu0 0.0
    %1231 = vmatprep.subr.mxu0 0.0
    %1232 = vmatpush2.xpose.msra.mxu0 0.0
    %1233 = vmatprep.subr.mxu0 0.0
    %1234 = vmatpush2.xpose.msra.mxu0 0.0
    %1235 = vmatprep.subr.mxu0 0.0
    %1236 = vmatpush2.xpose.msra.mxu0 0.0
    %1237 = vmatprep.subr.mxu0 0.0
    %1238 = vmatpush2.xpose.msra.mxu0 0.0
    %1239 = vmatprep.subr.mxu0 0.0
    %1240 = vmatpush2.xpose.msra.mxu0 0.0
    %1241 = vmatprep.subr.mxu0 0.0
    %1242 = vmatpush2.xpose.msra.mxu0 0.0
    %1243 = vmatprep.mubr.f32.mxu0 0.0
    %1244 = vmatmul.mubr.f32.gmra.mxu0 %v389
    %v1245 = vpop.f32.mrf.mxu0
    %v1246 = vadd.f32 0.0, %v1245
    %v1247 = vpop.f32.mrf.mxu0
    %1248 = vdwg.mxu0
    %v1249 = vsel %vm1155, %v1162, %v1246
    %1250 = vst [vmem:[#allocation9] sm:$0xff] %v1249
    %v1251 = vld [vmem:[%s7] sm:$0xff]
    %v1252 = vld [vmem:[%s7 + $0x8] sm:$0xff]
    %v1253 = vld [vmem:[%s7 + $0x10] sm:$0xff]
    %v1254 = vld [vmem:[%s7 + $0x18] sm:$0xff]
    %v1255 = vld [vmem:[%s7 + $0x20] sm:$0xff]
    %v1256 = vld [vmem:[%s7 + $0x28] sm:$0xff]
    %v1257 = vld [vmem:[%s7 + $0x30] sm:$0xff]
    %v1258 = vld [vmem:[%s7 + $0x38] sm:$0xff]
    %v1259 = vld [vmem:[%s7 + $0x40] sm:$0xff]
    %v1260 = vld [vmem:[%s7 + $0x48] sm:$0xff]
    %v1261 = vld [vmem:[%s7 + $0x50] sm:$0xff]
    %v1262 = vld [vmem:[%s7 + $0x58] sm:$0xff]
    %v1263 = vld [vmem:[%s7 + $0x60] sm:$0xff]
    %v1264 = vld [vmem:[%s7 + $0x68] sm:$0xff]
    %v1265 = vld [vmem:[%s7 + $0x70] sm:$0xff]
    %v1266 = vld [vmem:[%s7 + $0x78] sm:$0xff]
    %1267 = vst [vmem:[%s14] sm:$0xff] %v1251
    %1268 = vst [vmem:[%s14 + $0x8] sm:$0xff] %v1252
    %1269 = vst [vmem:[%s14 + $0x10] sm:$0xff] %v1253
    %1270 = vst [vmem:[%s14 + $0x18] sm:$0xff] %v1254
    %1271 = vst [vmem:[%s14 + $0x20] sm:$0xff] %v1255
    %1272 = vst [vmem:[%s14 + $0x28] sm:$0xff] %v1256
    %1273 = vst [vmem:[%s14 + $0x30] sm:$0xff] %v1257
    %1274 = vst [vmem:[%s14 + $0x38] sm:$0xff] %v1258
    %1275 = vst [vmem:[%s14 + $0x40] sm:$0xff] %v1259
    %1276 = vst [vmem:[%s14 + $0x48] sm:$0xff] %v1260
    %1277 = vst [vmem:[%s14 + $0x50] sm:$0xff] %v1261
    %1278 = vst [vmem:[%s14 + $0x58] sm:$0xff] %v1262
    %1279 = vst [vmem:[%s14 + $0x60] sm:$0xff] %v1263
    %1280 = vst [vmem:[%s14 + $0x68] sm:$0xff] %v1264
    %1281 = vst [vmem:[%s14 + $0x70] sm:$0xff] %v1265
    %1282 = vst [vmem:[%s14 + $0x78] sm:$0xff] %v1266
    %s1283 = sld [smem:[#allocation6]]
    %s1284 = scalar_lea.smem [#allocation2], 0
    %1285 = sst [smem:[%s1284]] %s1283
    %s1286 = sld [smem:[#allocation6 + $0x1]]
    %s1287 = scalar_lea.smem [#allocation2], 1
    %1288 = sst [smem:[%s1287]] %s1286
    %s1289 = sld [smem:[#allocation6 + $0x2]]
    %s1290 = scalar_lea.smem [#allocation2], 2
    %1291 = sst [smem:[%s1290]] %s1289
    %s1292 = sld [smem:[#allocation6 + $0x3]]
    %s1293 = scalar_lea.smem [#allocation2], 3
    %1294 = sst [smem:[%s1293]] %s1292
    %s1295 = sld [smem:[#allocation3]]
    %s1296 = sld [smem:[#allocation2 + %s1295]]
    %s1297 = sadd.s32 %s1296, 1
    %s1298 = scalar_lea.vmem %s14, %s1297
    %1299 = vst [vmem:[%s1298] sm:$0x1] %v1063
    %s1300 = smul.u32 %s1295, 12
    %s1301 = ssub.s32 %s1297, %s1300
    %p1302 = scmp.ge.s32.totalorder %s1301, 12
    %s1303 = scalar_select %p1302, %s1300, %s1297
    %s1304 = scalar_lea.smem [#allocation2], %s1295
    %1305 = sst [smem:[%s1304]] %s1303
    %s1306 = sld [smem:[#allocation3 + $0x1]]
    %s1307 = sld [smem:[#allocation2 + %s1306]]
    %s1308 = sadd.s32 %s1307, 1
    %s1309 = scalar_lea.vmem %s14, %s1308
    %1310 = vst [vmem:[%s1309 - $0x1] sm:$0x2] %v1063
    %s1311 = smul.u32 %s1306, 12
    %s1312 = ssub.s32 %s1308, %s1311
    %p1313 = scmp.ge.s32.totalorder %s1312, 12
    %s1314 = scalar_select %p1313, %s1311, %s1308
    %s1315 = scalar_lea.smem [#allocation2], %s1306
    %1316 = sst [smem:[%s1315]] %s1314
    %s1317 = sld [smem:[#allocation3 + $0x2]]
    %s1318 = sld [smem:[#allocation2 + %s1317]]
    %s1319 = sadd.s32 %s1318, 1
    %s1320 = scalar_lea.vmem %s14, %s1319
    %1321 = vst [vmem:[%s1320 - $0x2] sm:$0x4] %v1063
    %s1322 = smul.u32 %s1317, 12
    %s1323 = ssub.s32 %s1319, %s1322
    %p1324 = scmp.ge.s32.totalorder %s1323, 12
    %s1325 = scalar_select %p1324, %s1322, %s1319
    %s1326 = scalar_lea.smem [#allocation2], %s1317
    %1327 = sst [smem:[%s1326]] %s1325
    %s1328 = sld [smem:[#allocation3 + $0x3]]
    %s1329 = sld [smem:[#allocation2 + %s1328]]
    %s1330 = sadd.s32 %s1329, 1
    %s1331 = scalar_lea.vmem %s14, %s1330
    %1332 = vst [vmem:[%s1331 - $0x3] sm:$0x8] %v1063
    %s1333 = smul.u32 %s1328, 12
    %s1334 = ssub.s32 %s1330, %s1333
    %p1335 = scmp.ge.s32.totalorder %s1334, 12
    %s1336 = scalar_select %p1335, %s1333, %s1330
    %s1337 = scalar_lea.smem [#allocation2], %s1328
    %1338 = sst [smem:[%s1337]] %s1336
    %s1339 = sld [smem:[#allocation3 + $0x4]]
    %s1340 = sld [smem:[#allocation2 + %s1339]]
    %s1341 = sadd.s32 %s1340, 1
    %s1342 = scalar_lea.vmem %s14, %s1341
    %1343 = vst [vmem:[%s1342 - $0x4] sm:$0x10] %v1063
    %s1344 = smul.u32 %s1339, 12
    %s1345 = ssub.s32 %s1341, %s1344
    %p1346 = scmp.ge.s32.totalorder %s1345, 12
    %s1347 = scalar_select %p1346, %s1344, %s1341
    %s1348 = scalar_lea.smem [#allocation2], %s1339
    %1349 = sst [smem:[%s1348]] %s1347
    %s1350 = sld [smem:[#allocation3 + $0x5]]
    %s1351 = sld [smem:[#allocation2 + %s1350]]
    %s1352 = sadd.s32 %s1351, 1
    %s1353 = scalar_lea.vmem %s14, %s1352
    %1354 = vst [vmem:[%s1353 - $0x5] sm:$0x20] %v1063
    %s1355 = smul.u32 %s1350, 12
    %s1356 = ssub.s32 %s1352, %s1355
    %p1357 = scmp.ge.s32.totalorder %s1356, 12
    %s1358 = scalar_select %p1357, %s1355, %s1352
    %s1359 = scalar_lea.smem [#allocation2], %s1350
    %1360 = sst [smem:[%s1359]] %s1358
    %s1361 = sld [smem:[#allocation3 + $0x6]]
    %s1362 = sld [smem:[#allocation2 + %s1361]]
    %s1363 = sadd.s32 %s1362, 1
    %s1364 = scalar_lea.vmem %s14, %s1363
    %1365 = vst [vmem:[%s1364 - $0x6] sm:$0x40] %v1063
    %s1366 = smul.u32 %s1361, 12
    %s1367 = ssub.s32 %s1363, %s1366
    %p1368 = scmp.ge.s32.totalorder %s1367, 12
    %s1369 = scalar_select %p1368, %s1366, %s1363
    %s1370 = scalar_lea.smem [#allocation2], %s1361
    %1371 = sst [smem:[%s1370]] %s1369
    %s1372 = sld [smem:[#allocation3 + $0x7]]
    %s1373 = sld [smem:[#allocation2 + %s1372]]
    %s1374 = sadd.s32 %s1373, 1
    %s1375 = scalar_lea.vmem %s14, %s1374
    %1376 = vst [vmem:[%s1375 - $0x7] sm:$0x80] %v1063
    %s1377 = smul.u32 %s1372, 12
    %s1378 = ssub.s32 %s1374, %s1377
    %p1379 = scmp.ge.s32.totalorder %s1378, 12
    %s1380 = scalar_select %p1379, %s1377, %s1374
    %s1381 = scalar_lea.smem [#allocation2], %s1372
    %1382 = sst [smem:[%s1381]] %s1380
    // Predicated region
    $region50: #{moco_forward.1} parent=1 // pred_check
      _
    $region51: #{moco_forward.1} parent=1 // pred_check_branch
      %1384 = sbr.rel (0) target = $region53
    $region52: #{moco_forward.1} parent=1 // pred_region
      %s1386 = ssub.s32 128, 128
      %1387 = vsyncadd [#allocation4], %s1386
      %s1389 = sshll.u32 [#allocation8], 4
      %s1390 = int_to_ptr.vmem [resolvable:$true] %s1389
      %1392 = dma.vmem_to_hbm [thread:$0]  %s1390, 128, %s10, [#allocation4]
    $region53: #{moco_forward.1} parent=1 // pred_fallthru
      _
    // Predicated region
    $region54: #{moco_forward.1} parent=1 // pred_check
      _
    $region55: #{moco_forward.1} parent=1 // pred_check_branch
      %1394 = sbr.rel (0) target = $region57
    $region56: #{moco_forward.1} parent=1 // pred_region
      %s1396 = ssub.s32 128, 128
      %1397 = vsyncadd [#allocation10], %s1396
      %s1399 = sshll.u32 [#allocation9], 4
      %s1400 = int_to_ptr.vmem [resolvable:$true] %s1399
      %1402 = dma.vmem_to_hbm [thread:$0]  %s1400, 128, %s11, [#allocation10]
    $region57: #{moco_forward.1} parent=1 // pred_fallthru
      _
    // Predicated region
    $region58: #{moco_forward.1} parent=1 // pred_check
      _
    $region59: #{moco_forward.1} parent=1 // pred_check_branch
      %1404 = sbr.rel (0) target = $region61
    $region60: #{moco_forward.1} parent=1 // pred_region
      _
    $region61: #{moco_forward.1} parent=1 // pred_fallthru
      _
    // Predicated region
    $region62: #{moco_forward.1} parent=1 // pred_check
      _
    $region63: #{moco_forward.1} parent=1 // pred_check_branch
      %1406 = sbr.rel (0) target = $region65
    $region64: #{moco_forward.1} parent=1 // pred_region
      _
    $region65: #{moco_forward.1} parent=1 // pred_fallthru
      _
    // Predicated region
    $region66: #{moco_forward.1} parent=1 // pred_check
      _
    $region67: #{moco_forward.1} parent=1 // pred_check_branch
      %1408 = sbr.rel (0) target = $region69
    $region68: #{moco_forward.1} parent=1 // pred_region
      _
    $region69: #{moco_forward.1} parent=1 // pred_fallthru
      _
    // Predicated region
    $region70: #{moco_forward.1} parent=1 // pred_check
      _
    $region71: #{moco_forward.1} parent=1 // pred_check_branch
      %1410 = sbr.rel (0) target = $region73
    $region72: #{moco_forward.1} parent=1 // pred_region
      %1411 = dma.done [#allocation4], 128
    $region73: #{moco_forward.1} parent=1 // pred_fallthru
      _
    // Predicated region
    $region74: #{moco_forward.1} parent=1 // pred_check
      _
    $region75: #{moco_forward.1} parent=1 // pred_check_branch
      %1413 = sbr.rel (0) target = $region77
    $region76: #{moco_forward.1} parent=1 // pred_region
      %1414 = dma.done [#allocation10], 128
    $region77: #{moco_forward.1} parent=1 // pred_fallthru
      _
    // Predicated region
    $region78: #{moco_forward.1} parent=1 // pred_check
      _
    $region79: #{moco_forward.1} parent=1 // pred_check_branch
      %1416 = sbr.rel (0) target = $region81
    $region80: #{moco_forward.1} parent=1 // pred_region
      _
    $region81: #{moco_forward.1} parent=1 // pred_fallthru
      _
    // Predicated region
    $region82: #{moco_forward.1} parent=1 // pred_check
      _
    $region83: #{moco_forward.1} parent=1 // pred_check_branch
      %1418 = sbr.rel (0) target = $region85
    $region84: #{moco_forward.1} parent=1 // pred_region
      _
    $region85: #{moco_forward.1} parent=1 // pred_fallthru
      _
    // Predicated region
    $region86: #{moco_forward.1} parent=1 // pred_check
      _
    $region87: #{moco_forward.1} parent=1 // pred_check_branch
      %1420 = sbr.rel (0) target = $region89
    $region88: #{moco_forward.1} parent=1 // pred_region
      _
    $region89: #{moco_forward.1} parent=1 // pred_fallthru
      _
    %1421 = vsyncpa [#allocation4], 1
    %1422 = vsyncpa [#allocation10], 1
    %1423 = vsyncpa [#allocation5], 1
    %1424 = vsyncpa [#allocation7], 1

</llo_original>
